<compile_context>
chip_gen: v6e
topology: v6e:2x2x1
jax: 0.10.0
libtpu: 0.0.40
codegen_flags: <defaults>
</compile_context>

<pallas_src>
import jax
import jax.numpy as jnp
from jax.experimental import pallas as pl
from jax.experimental.pallas import tpu as pltpu


def _leaky_relu(x, slope=0.2):
    return jnp.where(x >= 0, x, slope * x)


def encoder_kernel(x_ref, w1_ref, b1_ref, w2_ref, b2_ref, wmv_ref, bmv_ref,
                   out_ref):
    # Layer 1: Linear(input_dim -> hidden_dim) + LeakyReLU(0.2)
    x = x_ref[...].astype(jnp.bfloat16)
    h = jnp.dot(x, w1_ref[...], preferred_element_type=jnp.float32) + b1_ref[...]
    h = _leaky_relu(h).astype(jnp.bfloat16)

    # Layer 2: Linear(hidden_dim -> hidden_dim) + LeakyReLU(0.2)
    h = jnp.dot(h, w2_ref[...], preferred_element_type=jnp.float32) + b2_ref[...]
    h = _leaky_relu(h).astype(jnp.bfloat16)

    # Fused heads: [mean | log_var] in one (batch_tile, 2L) lane-dense store.
    out_ref[...] = (
        jnp.dot(h, wmv_ref[...], preferred_element_type=jnp.float32)
        + bmv_ref[...]
    ).astype(out_ref.dtype)


def encoder_forward(x, params, *, batch_tile=128):
    """Run the fused encoder.

    x: (B, input_dim) f32.  Returns (mean, log_var), each (B, latent_dim) f32.
    """
    w1, b1, w2, b2, wm, bm, wv, bv = params
    B, D = x.shape
    H = w1.shape[1]
    L = wm.shape[1]
    assert B % batch_tile == 0, "pad batch to a multiple of batch_tile"

    # Fuse the two heads into one N = 2L matmul.
    wmv = jnp.concatenate([wm, wv], axis=1)          # (H, 2L) bf16
    bmv = jnp.concatenate([bm, bv], axis=1)          # (1, 2L) f32

    grid = (B // batch_tile,)
    full = lambda i: (0, 0)                          # weights stay resident

    in_specs = [
        pl.BlockSpec((batch_tile, D), lambda i: (i, 0)),   # x (streamed)
        pl.BlockSpec((D, H), full),                        # W1
        pl.BlockSpec((1, H), full),                        # b1
        pl.BlockSpec((H, H), full),                        # W2
        pl.BlockSpec((1, H), full),                        # b2
        pl.BlockSpec((H, 2 * L), full),                    # [Wm | Wv]
        pl.BlockSpec((1, 2 * L), full),                    # [bm | bv]
    ]
    out_specs = pl.BlockSpec((batch_tile, 2 * L), lambda i: (i, 0))
    out_shape = jax.ShapeDtypeStruct((B, 2 * L), jnp.float32)

    flops = 2 * B * (D * H + H * H + H * 2 * L)
    bytes_accessed = (
        B * D * 4                      # x (f32)
        + (D * H + H * H + H * 2 * L) * 2   # bf16 weights
        + (H + H + 2 * L) * 4          # f32 biases
        + B * 2 * L * 4                # output
    )

    out = pl.pallas_call(
        encoder_kernel,
        grid=grid,
        in_specs=in_specs,
        out_specs=out_specs,
        out_shape=out_shape,
        compiler_params=pltpu.CompilerParams(
            dimension_semantics=("parallel",)),
        cost_estimate=pl.CostEstimate(
            flops=flops, transcendentals=0, bytes_accessed=bytes_accessed),
    )(x, w1, b1, w2, b2, wmv, bmv)

    mean, log_var = out[:, :L], out[:, L:]
    return mean, log_var


def init_params(key, input_dim, hidden_dim, latent_dim):
    """Deterministic synthetic parameters.

    Linear weights are stored pre-transposed as (in, out) in bfloat16;
    biases as (1, out) in float32.
    """
    ks = jax.random.split(key, 8)

    def lin(kw, kb, fan_in, fan_out):
        bound = 1.0 / jnp.sqrt(fan_in)
        w = jax.random.uniform(kw, (fan_in, fan_out), jnp.float32, -bound, bound)
        b = jax.random.uniform(kb, (1, fan_out), jnp.float32, -bound, bound)
        return w.astype(jnp.bfloat16), b

    w1, b1 = lin(ks[0], ks[1], input_dim, hidden_dim)
    w2, b2 = lin(ks[2], ks[3], hidden_dim, hidden_dim)
    wm, bm = lin(ks[4], ks[5], hidden_dim, latent_dim)
    wv, bv = lin(ks[6], ks[7], hidden_dim, latent_dim)
    return (w1, b1, w2, b2, wm, bm, wv, bv)


def encoder_ref(x, params):
    """Pure-JAX reference replicating the kernel's bf16-matmul / f32-accum path."""
    w1, b1, w2, b2, wm, bm, wv, bv = params
    xb = x.astype(jnp.bfloat16)
    h = jnp.dot(xb, w1, preferred_element_type=jnp.float32) + b1
    h = _leaky_relu(h).astype(jnp.bfloat16)
    h = jnp.dot(h, w2, preferred_element_type=jnp.float32) + b2
    h = _leaky_relu(h).astype(jnp.bfloat16)
    mean = jnp.dot(h, wm, preferred_element_type=jnp.float32) + bm
    log_var = jnp.dot(h, wv, preferred_element_type=jnp.float32) + bv
    return mean, log_var


if __name__ == "__main__":
    # TPU-friendly 128-multiples standing in for the module's
    # input_dim -> hidden_dim=400 -> latent_dim=200 stack.
    B, INPUT_DIM, HIDDEN_DIM, LATENT_DIM = 256, 256, 256, 128

    key = jax.random.PRNGKey(0)
    kx, kp = jax.random.split(key)
    x = jax.random.normal(kx, (B, INPUT_DIM), jnp.float32)
    params = init_params(kp, INPUT_DIM, HIDDEN_DIM, LATENT_DIM)

    mean, log_var = encoder_forward(x, params, batch_tile=128)
    jax.block_until_ready((mean, log_var))

    # Correctness check vs. pure-JAX reference (same bf16/f32 math).
    mean_ref, logvar_ref = encoder_ref(x, params)
    assert mean.shape == (B, LATENT_DIM) and log_var.shape == (B, LATENT_DIM)
    assert jnp.allclose(mean, mean_ref, atol=1e-2, rtol=1e-2)
    assert jnp.allclose(log_var, logvar_ref, atol=1e-2, rtol=1e-2)

    print("KERNEL_OK")
</pallas_src>

<mosaic_0001>
module attributes {stable_mosaic.version = 11 : i64} {
  func.func @encoder_kernel(%arg0: i32, %arg1: memref<128x256xf32, #tpu.memory_space<vmem>>, %arg2: memref<256x256xbf16, #tpu.memory_space<vmem>>, %arg3: memref<1x256xf32, #tpu.memory_space<vmem>>, %arg4: memref<256x256xbf16, #tpu.memory_space<vmem>>, %arg5: memref<1x256xf32, #tpu.memory_space<vmem>>, %arg6: memref<256x256xbf16, #tpu.memory_space<vmem>>, %arg7: memref<1x256xf32, #tpu.memory_space<vmem>>, %arg8: memref<128x256xf32, #tpu.memory_space<vmem>>) attributes {dimension_semantics = [#tpu.dimension_semantics<parallel>], iteration_bounds = array<i64: 2>, scalar_prefetch = 0 : i64, scratch_operands = 0 : i64, tpu.core_type = #tpu.core_type<tc>, window_params = [{transform_indices = @transform_0, window_bounds = array<i64: 128, 256>}, {pipeline_mode = #tpu.pipeline_mode<synchronous>, transform_indices = @transform_1, window_bounds = array<i64: 256, 256>}, {pipeline_mode = #tpu.pipeline_mode<synchronous>, transform_indices = @transform_2, window_bounds = array<i64: 1, 256>}, {pipeline_mode = #tpu.pipeline_mode<synchronous>, transform_indices = @transform_3, window_bounds = array<i64: 256, 256>}, {pipeline_mode = #tpu.pipeline_mode<synchronous>, transform_indices = @transform_4, window_bounds = array<i64: 1, 256>}, {pipeline_mode = #tpu.pipeline_mode<synchronous>, transform_indices = @transform_5, window_bounds = array<i64: 256, 256>}, {pipeline_mode = #tpu.pipeline_mode<synchronous>, transform_indices = @transform_6, window_bounds = array<i64: 1, 256>}, {transform_indices = @transform_7, window_bounds = array<i64: 128, 256>}]} {
    %c0 = arith.constant 0 : index
    %c0_0 = arith.constant 0 : index
    %0 = vector.load %arg1[%c0, %c0_0] : memref<128x256xf32, #tpu.memory_space<vmem>>, vector<128x256xf32>
    %1 = arith.truncf %0 : vector<128x256xf32> to vector<128x256xbf16>
    %c0_1 = arith.constant 0 : index
    %c0_2 = arith.constant 0 : index
    %2 = vector.load %arg2[%c0_1, %c0_2] : memref<256x256xbf16, #tpu.memory_space<vmem>>, vector<256x256xbf16>
    %cst = arith.constant dense<0.000000e+00> : vector<128x256xf32>
    %3 = tpu.matmul %1, %2, %cst {dimension_numbers = #tpu.dot_dimension_numbers<[1], [0], [0], [1], [0, 0, 1, 1], [], []>} : vector<128x256xbf16>, vector<256x256xbf16>, vector<128x256xf32> -> vector<128x256xf32>
    %c0_3 = arith.constant 0 : index
    %c0_4 = arith.constant 0 : index
    %4 = vector.load %arg3[%c0_3, %c0_4] : memref<1x256xf32, #tpu.memory_space<vmem>>, vector<1x256xf32>
    %5 = vector.broadcast %4 : vector<1x256xf32> to vector<128x256xf32>
    %6 = arith.addf %3, %5 : vector<128x256xf32>
    %cst_5 = arith.constant 0.000000e+00 : f32
    %7 = vector.broadcast %cst_5 : f32 to vector<128x256xf32>
    %8 = arith.cmpf oge, %6, %7 : vector<128x256xf32>
    %cst_6 = arith.constant 2.000000e-01 : f32
    %9 = vector.broadcast %cst_6 : f32 to vector<128x256xf32>
    %10 = arith.mulf %9, %6 : vector<128x256xf32>
    %11 = arith.select %8, %6, %10 : vector<128x256xi1>, vector<128x256xf32>
    %12 = arith.truncf %11 : vector<128x256xf32> to vector<128x256xbf16>
    %c0_7 = arith.constant 0 : index
    %c0_8 = arith.constant 0 : index
    %13 = vector.load %arg4[%c0_7, %c0_8] : memref<256x256xbf16, #tpu.memory_space<vmem>>, vector<256x256xbf16>
    %cst_9 = arith.constant dense<0.000000e+00> : vector<128x256xf32>
    %14 = tpu.matmul %12, %13, %cst_9 {dimension_numbers = #tpu.dot_dimension_numbers<[1], [0], [0], [1], [0, 0, 1, 1], [], []>} : vector<128x256xbf16>, vector<256x256xbf16>, vector<128x256xf32> -> vector<128x256xf32>
    %c0_10 = arith.constant 0 : index
    %c0_11 = arith.constant 0 : index
    %15 = vector.load %arg5[%c0_10, %c0_11] : memref<1x256xf32, #tpu.memory_space<vmem>>, vector<1x256xf32>
    %16 = vector.broadcast %15 : vector<1x256xf32> to vector<128x256xf32>
    %17 = arith.addf %14, %16 : vector<128x256xf32>
    %cst_12 = arith.constant 0.000000e+00 : f32
    %18 = vector.broadcast %cst_12 : f32 to vector<128x256xf32>
    %19 = arith.cmpf oge, %17, %18 : vector<128x256xf32>
    %cst_13 = arith.constant 2.000000e-01 : f32
    %20 = vector.broadcast %cst_13 : f32 to vector<128x256xf32>
    %21 = arith.mulf %20, %17 : vector<128x256xf32>
    %22 = arith.select %19, %17, %21 : vector<128x256xi1>, vector<128x256xf32>
    %23 = arith.truncf %22 : vector<128x256xf32> to vector<128x256xbf16>
    %c0_14 = arith.constant 0 : index
    %c0_15 = arith.constant 0 : index
    %24 = vector.load %arg6[%c0_14, %c0_15] : memref<256x256xbf16, #tpu.memory_space<vmem>>, vector<256x256xbf16>
    %cst_16 = arith.constant dense<0.000000e+00> : vector<128x256xf32>
    %25 = tpu.matmul %23, %24, %cst_16 {dimension_numbers = #tpu.dot_dimension_numbers<[1], [0], [0], [1], [0, 0, 1, 1], [], []>} : vector<128x256xbf16>, vector<256x256xbf16>, vector<128x256xf32> -> vector<128x256xf32>
    %c0_17 = arith.constant 0 : index
    %c0_18 = arith.constant 0 : index
    %26 = vector.load %arg7[%c0_17, %c0_18] : memref<1x256xf32, #tpu.memory_space<vmem>>, vector<1x256xf32>
    %27 = vector.broadcast %26 : vector<1x256xf32> to vector<128x256xf32>
    %28 = arith.addf %25, %27 : vector<128x256xf32>
    %c0_19 = arith.constant 0 : index
    %c0_20 = arith.constant 0 : index
    %29 = vector.load %arg8[%c0_19, %c0_20] : memref<128x256xf32, #tpu.memory_space<vmem>>, vector<128x256xf32>
    tpu.vector_store %arg8[%c0_19, %c0_20], %28 {strides = array<i32>} : memref<128x256xf32, #tpu.memory_space<vmem>>, vector<128x256xf32>,
    return
  }
  func.func @transform_0(%arg0: i32) -> (i32, i32) {
    %c0_i32 = arith.constant 0 : i32
    %c0_i32_0 = arith.constant 0 : i32
    return %arg0, %c0_i32 : i32, i32
  }
  func.func @transform_1(%arg0: i32) -> (i32, i32) {
    %c0_i32 = arith.constant 0 : i32
    %c0_i32_0 = arith.constant 0 : i32
    %c0_i32_1 = arith.constant 0 : i32
    return %c0_i32, %c0_i32_0 : i32, i32
  }
  func.func @transform_2(%arg0: i32) -> (i32, i32) {
    %c0_i32 = arith.constant 0 : i32
    %c0_i32_0 = arith.constant 0 : i32
    %c0_i32_1 = arith.constant 0 : i32
    return %c0_i32, %c0_i32_0 : i32, i32
  }
  func.func @transform_3(%arg0: i32) -> (i32, i32) {
    %c0_i32 = arith.constant 0 : i32
    %c0_i32_0 = arith.constant 0 : i32
    %c0_i32_1 = arith.constant 0 : i32
    return %c0_i32, %c0_i32_0 : i32, i32
  }
  func.func @transform_4(%arg0: i32) -> (i32, i32) {
    %c0_i32 = arith.constant 0 : i32
    %c0_i32_0 = arith.constant 0 : i32
    %c0_i32_1 = arith.constant 0 : i32
    return %c0_i32, %c0_i32_0 : i32, i32
  }
  func.func @transform_5(%arg0: i32) -> (i32, i32) {
    %c0_i32 = arith.constant 0 : i32
    %c0_i32_0 = arith.constant 0 : i32
    %c0_i32_1 = arith.constant 0 : i32
    return %c0_i32, %c0_i32_0 : i32, i32
  }
  func.func @transform_6(%arg0: i32) -> (i32, i32) {
    %c0_i32 = arith.constant 0 : i32
    %c0_i32_0 = arith.constant 0 : i32
    %c0_i32_1 = arith.constant 0 : i32
    return %c0_i32, %c0_i32_0 : i32, i32
  }
  func.func @transform_7(%arg0: i32) -> (i32, i32) {
    %c0_i32 = arith.constant 0 : i32
    %c0_i32_0 = arith.constant 0 : i32
    return %arg0, %c0_i32 : i32, i32
  }
}

</mosaic_0001>

<llo_original>
// kernel: tpu_custom_call.1
$region0: #{tpu_custom_call.1}
  #allocation0 [shape = 'u32[]', space=smem, size = 0x4, offset = 0x4, fixed_abs, tag = 'smem constant byte address 0x4 - core index']
  #allocation1 [shape = 'u32[144,128]{1,0:T(1,128)}', space=vmem, size = 0x12000, scoped, tag = 'internal scratch']
  %s0 = inlined_call_operand.hbm [shape: f32[256,256], index: 0, kind: input, shape index: {}]
  %s1 = inlined_call_operand.hbm [shape: bf16[256,256], index: 1, kind: input, shape index: {}]
  %s2 = inlined_call_operand.vmem [shape: f32[1,256], index: 2, kind: input, shape index: {}]
  %s3 = inlined_call_operand.hbm [shape: bf16[256,256], index: 3, kind: input, shape index: {}]
  %s4 = inlined_call_operand.vmem [shape: f32[1,256], index: 4, kind: input, shape index: {}]
  %s5 = inlined_call_operand.hbm [shape: bf16[256,256], index: 5, kind: input, shape index: {}]
  %s6 = inlined_call_operand.vmem [shape: f32[1,256], index: 6, kind: input, shape index: {}]
  %s7 = inlined_call_operand.hbm [shape: f32[256,256], index: 7, kind: output, shape index: {}]
  %s8 = sld [smem:[#allocation0]]
  $region77: #{tpu_custom_call.1} parent=0
    _
  %s10 = ssub.s32 1, %s8
  %s11 = scalar_select 0, %s10, %s8
  $region1: #{tpu_custom_call.1} parent=0
    #allocation2 [shape = 'u8[262144]{0}', space=vmem, size = 0x40000, scoped, tag = 'input window, operand 0']
    #allocation3 [shape = 's32[2]{0}', space=sflag, size = 0x8, scoped, tag = 'scoped memory for tpu_custom_call.1']
    #allocation4 [shape = 's32[2]{0}', space=sflag, size = 0x8, scoped, tag = 'scoped memory for tpu_custom_call.1']
    #allocation5 [shape = 'u8[131072]{0}', space=vmem, size = 0x20000, scoped, tag = 'input window, operand 1, single buffered']
    #allocation6 [shape = 's32[1]{0}', space=sflag, size = 0x4, scoped, tag = 'scoped memory for tpu_custom_call.1']
    #allocation7 [shape = 'u8[131072]{0}', space=vmem, size = 0x20000, scoped, tag = 'input window, operand 3, single buffered']
    #allocation8 [shape = 'u8[131072]{0}', space=vmem, size = 0x20000, scoped, tag = 'input window, operand 5, single buffered']
    #allocation9 [shape = 's32[1]{0}', space=sflag, size = 0x4, scoped, tag = 'scoped memory for tpu_custom_call.1']
    #allocation10 [shape = 'u8[262144]{0}', space=vmem, size = 0x40000, scoped, tag = 'output window, operand 0']
    %12 = vsyncpa [#allocation3], 0
    %s13 = scalar_lea.sflag [#allocation3], 1
    %14 = vsyncpa %s13, 0
    %15 = vsyncpa [#allocation6], 0
    %16 = vsyncpa [#allocation9], 0
    %17 = vsyncpa [#allocation4], 0
    %s18 = scalar_lea.sflag [#allocation4], 1
    %19 = vsyncpa %s18, 0
    loop: start=0, step=1, limit=4
    $region2: #{tpu_custom_call.1} parent=1 // loop_pre_header
      _
    $region3: #{tpu_custom_call.1} parent=1 // loop_header
      %s21 = sphi 0, %s25
      %p22 = scmp.ge.s32.totalorder %s21, 4
      %s31 = sphi 0, %s33
      %s34 = sphi 0, %s31
      %s35 = sphi 0, %s34
      %s51 = sphi 0, %s35
      %s55 = sphi 0, %s55
      %s57 = sphi 0, %s55
      %s58 = sphi 0, %s57
      %s72 = sphi 0, %s58
      %s76 = sphi 0, %s76
      %s78 = sphi 0, %s76
      %s79 = sphi 0, %s78
      %s93 = sphi 0, %s79
      %s97 = sphi 0, %s97
      %s99 = sphi 0, %s97
      %s100 = sphi 0, %s99
      %s114 = sphi 0, %s100
      %s118 = sphi 0, %s118
      %s120 = sphi 0, %s118
      %s121 = sphi 0, %s120
      %s135 = sphi 0, %s121
      %s139 = sphi 0, %s139
      %s141 = sphi 0, %s139
      %s142 = sphi 0, %s141
      %s156 = sphi 0, %s142
      %s160 = sphi 0, %s160
      %s162 = sphi 0, %s160
      %s163 = sphi 0, %s162
      %s177 = sphi 0, %s163
      %s183 = sphi 0, %s185
      %s186 = sphi 0, %s183
      %s187 = sphi 0, %s186
      %s203 = sphi 0, %s187
    $region4: #{tpu_custom_call.1} parent=1 // loop_header_branch
      %24 = sbr.rel (%p22) target = $region8
    $region5: #{tpu_custom_call.1} parent=1 // loop_body
      %s26 = ssub.s32 %s21, 1
      %s27 = ssub.s32 %s21, 2
      %s28 = sadd.s32 %s21, 1
      %s29 = ssub.s32 %s21, %s28
      %p30 = scmp.eq.s32.totalorder %s29, 0
      %s32 = sadd.s32 %s31, 1
      %s33 = scalar_select %p30, %s31, %s32
      %p36 = pneg %p30
      %p37 = scmp.eq.s32.totalorder %s21, 1
      %p38 = por %p36, %p37
      %p39 = scmp.ne.s32.totalorder %s31, %s34
      %p40 = scmp.eq.s32.totalorder %s21, 0
      %p41 = por %p39, %p40
      %p42 = scmp.ne.s32.totalorder %s31, %s34
      %p43 = scmp.eq.s32.totalorder %s26, 1
      %p44 = por %p42, %p43
      %p45 = scmp.ne.s32.totalorder %s34, %s35
      %p46 = scmp.eq.s32.totalorder %s26, 0
      %p47 = por %p45, %p46
      %p48 = scmp.ne.s32.totalorder %s34, %s35
      %p49 = scmp.eq.s32.totalorder %s27, 1
      %p50 = por %p48, %p49
      %p52 = scmp.ne.s32.totalorder %s35, %s51
      %p53 = scmp.eq.s32.totalorder %s27, 0
      %p54 = por %p52, %p53
      %s56 = sadd.s32 %s55, 1
      %p59 = scmp.eq.s32.totalorder %s21, 1
      %p60 = scmp.ne.s32.totalorder %s55, %s57
      %p61 = scmp.eq.s32.totalorder %s21, 0
      %p62 = por %p60, %p61
      %p63 = scmp.ne.s32.totalorder %s55, %s57
      %p64 = scmp.eq.s32.totalorder %s26, 1
      %p65 = por %p63, %p64
      %p66 = scmp.ne.s32.totalorder %s57, %s58
      %p67 = scmp.eq.s32.totalorder %s26, 0
      %p68 = por %p66, %p67
      %p69 = scmp.ne.s32.totalorder %s57, %s58
      %p70 = scmp.eq.s32.totalorder %s27, 1
      %p71 = por %p69, %p70
      %p73 = scmp.ne.s32.totalorder %s58, %s72
      %p74 = scmp.eq.s32.totalorder %s27, 0
      %p75 = por %p73, %p74
      %s77 = sadd.s32 %s76, 1
      %p80 = scmp.eq.s32.totalorder %s21, 1
      %p81 = scmp.ne.s32.totalorder %s76, %s78
      %p82 = scmp.eq.s32.totalorder %s21, 0
      %p83 = por %p81, %p82
      %p84 = scmp.ne.s32.totalorder %s76, %s78
      %p85 = scmp.eq.s32.totalorder %s26, 1
      %p86 = por %p84, %p85
      %p87 = scmp.ne.s32.totalorder %s78, %s79
      %p88 = scmp.eq.s32.totalorder %s26, 0
      %p89 = por %p87, %p88
      %p90 = scmp.ne.s32.totalorder %s78, %s79
      %p91 = scmp.eq.s32.totalorder %s27, 1
      %p92 = por %p90, %p91
      %p94 = scmp.ne.s32.totalorder %s79, %s93
      %p95 = scmp.eq.s32.totalorder %s27, 0
      %p96 = por %p94, %p95
      %s98 = sadd.s32 %s97, 1
      %p101 = scmp.eq.s32.totalorder %s21, 1
      %p102 = scmp.ne.s32.totalorder %s97, %s99
      %p103 = scmp.eq.s32.totalorder %s21, 0
      %p104 = por %p102, %p103
      %p105 = scmp.ne.s32.totalorder %s97, %s99
      %p106 = scmp.eq.s32.totalorder %s26, 1
      %p107 = por %p105, %p106
      %p108 = scmp.ne.s32.totalorder %s99, %s100
      %p109 = scmp.eq.s32.totalorder %s26, 0
      %p110 = por %p108, %p109
      %p111 = scmp.ne.s32.totalorder %s99, %s100
      %p112 = scmp.eq.s32.totalorder %s27, 1
      %p113 = por %p111, %p112
      %p115 = scmp.ne.s32.totalorder %s100, %s114
      %p116 = scmp.eq.s32.totalorder %s27, 0
      %p117 = por %p115, %p116
      %s119 = sadd.s32 %s118, 1
      %p122 = scmp.eq.s32.totalorder %s21, 1
      %p123 = scmp.ne.s32.totalorder %s118, %s120
      %p124 = scmp.eq.s32.totalorder %s21, 0
      %p125 = por %p123, %p124
      %p126 = scmp.ne.s32.totalorder %s118, %s120
      %p127 = scmp.eq.s32.totalorder %s26, 1
      %p128 = por %p126, %p127
      %p129 = scmp.ne.s32.totalorder %s120, %s121
      %p130 = scmp.eq.s32.totalorder %s26, 0
      %p131 = por %p129, %p130
      %p132 = scmp.ne.s32.totalorder %s120, %s121
      %p133 = scmp.eq.s32.totalorder %s27, 1
      %p134 = por %p132, %p133
      %p136 = scmp.ne.s32.totalorder %s121, %s135
      %p137 = scmp.eq.s32.totalorder %s27, 0
      %p138 = por %p136, %p137
      %s140 = sadd.s32 %s139, 1
      %p143 = scmp.eq.s32.totalorder %s21, 1
      %p144 = scmp.ne.s32.totalorder %s139, %s141
      %p145 = scmp.eq.s32.totalorder %s21, 0
      %p146 = por %p144, %p145
      %p147 = scmp.ne.s32.totalorder %s139, %s141
      %p148 = scmp.eq.s32.totalorder %s26, 1
      %p149 = por %p147, %p148
      %p150 = scmp.ne.s32.totalorder %s141, %s142
      %p151 = scmp.eq.s32.totalorder %s26, 0
      %p152 = por %p150, %p151
      %p153 = scmp.ne.s32.totalorder %s141, %s142
      %p154 = scmp.eq.s32.totalorder %s27, 1
      %p155 = por %p153, %p154
      %p157 = scmp.ne.s32.totalorder %s142, %s156
      %p158 = scmp.eq.s32.totalorder %s27, 0
      %p159 = por %p157, %p158
      %s161 = sadd.s32 %s160, 1
      %p164 = scmp.eq.s32.totalorder %s21, 1
      %p165 = scmp.ne.s32.totalorder %s160, %s162
      %p166 = scmp.eq.s32.totalorder %s21, 0
      %p167 = por %p165, %p166
      %p168 = scmp.ne.s32.totalorder %s160, %s162
      %p169 = scmp.eq.s32.totalorder %s26, 1
      %p170 = por %p168, %p169
      %p171 = scmp.ne.s32.totalorder %s162, %s163
      %p172 = scmp.eq.s32.totalorder %s26, 0
      %p173 = por %p171, %p172
      %p174 = scmp.ne.s32.totalorder %s162, %s163
      %p175 = scmp.eq.s32.totalorder %s27, 1
      %p176 = por %p174, %p175
      %p178 = scmp.ne.s32.totalorder %s163, %s177
      %p179 = scmp.eq.s32.totalorder %s27, 0
      %p180 = por %p178, %p179
      %s181 = ssub.s32 %s21, %s28
      %p182 = scmp.eq.s32.totalorder %s181, 0
      %s184 = sadd.s32 %s183, 1
      %s185 = scalar_select %p182, %s183, %s184
      %p188 = pneg %p182
      %p189 = scmp.eq.s32.totalorder %s21, 1
      %p190 = por %p188, %p189
      %p191 = scmp.ne.s32.totalorder %s183, %s186
      %p192 = scmp.eq.s32.totalorder %s21, 0
      %p193 = por %p191, %p192
      %p194 = scmp.ne.s32.totalorder %s183, %s186
      %p195 = scmp.eq.s32.totalorder %s26, 1
      %p196 = por %p194, %p195
      %p197 = scmp.ne.s32.totalorder %s186, %s187
      %p198 = scmp.eq.s32.totalorder %s26, 0
      %p199 = por %p197, %p198
      %p200 = scmp.ne.s32.totalorder %s186, %s187
      %p201 = scmp.eq.s32.totalorder %s27, 1
      %p202 = por %p200, %p201
      %p204 = scmp.ne.s32.totalorder %s187, %s203
      %p205 = scmp.eq.s32.totalorder %s27, 0
      %p206 = por %p204, %p205
      %p207 = scmp.le.s32.totalorder 1, %s21
      %p208 = scmp.lt.s32.totalorder %s21, 3
      %p209 = pnand %p207, %p208
      %p210 = pneg %p209
      // Predicated region
      $region9: #{tpu_custom_call.1} parent=5 // pred_check
        _
      $region10: #{tpu_custom_call.1} parent=5 // pred_check_branch
        %212 = sbr.rel (%p209) target = $region12
      $region11: #{tpu_custom_call.1} parent=5 // pred_region
        %s213 = ssub.s32 %s21, 1
        // Predicated region
        $region13: #{tpu_custom_call.1} parent=11 // pred_check
          %p214 = pneg %p68
        $region14: #{tpu_custom_call.1} parent=11 // pred_check_branch
          %216 = sbr.rel (%p214) target = $region16
        $region15: #{tpu_custom_call.1} parent=11 // pred_region
          %s218 = ssub.s32 4096, 4096
          %219 = vsyncadd [#allocation6], %s218
          %s220 = sshll.u32 [#allocation5], 4
          %s221 = int_to_ptr.vmem [resolvable:$true] %s220
          %226 = dma.hbm_to_vmem [thread:$0]  %s1, 4096, %s221, [#allocation6], 128, 128, 8
        $region16: #{tpu_custom_call.1} parent=11 // pred_fallthru
          _
        // Predicated region
        $region17: #{tpu_custom_call.1} parent=11 // pred_check
          %p227 = pneg %p89
        $region18: #{tpu_custom_call.1} parent=11 // pred_check_branch
          %229 = sbr.rel (%p227) target = $region20
        $region19: #{tpu_custom_call.1} parent=11 // pred_region
          _
        $region20: #{tpu_custom_call.1} parent=11 // pred_fallthru
          _
        // Predicated region
        $region21: #{tpu_custom_call.1} parent=11 // pred_check
          %p230 = pneg %p110
        $region22: #{tpu_custom_call.1} parent=11 // pred_check_branch
          %232 = sbr.rel (%p230) target = $region24
        $region23: #{tpu_custom_call.1} parent=11 // pred_region
          %s234 = ssub.s32 4096, 4096
          %235 = vsyncadd [#allocation6], %s234
          %s236 = sshll.u32 [#allocation7], 4
          %s237 = int_to_ptr.vmem [resolvable:$true] %s236
          %242 = dma.hbm_to_vmem [thread:$0]  %s3, 4096, %s237, [#allocation6], 128, 128, 8
        $region24: #{tpu_custom_call.1} parent=11 // pred_fallthru
          _
        // Predicated region
        $region25: #{tpu_custom_call.1} parent=11 // pred_check
          %p243 = pneg %p131
        $region26: #{tpu_custom_call.1} parent=11 // pred_check_branch
          %245 = sbr.rel (%p243) target = $region28
        $region27: #{tpu_custom_call.1} parent=11 // pred_region
          _
        $region28: #{tpu_custom_call.1} parent=11 // pred_fallthru
          _
        // Predicated region
        $region29: #{tpu_custom_call.1} parent=11 // pred_check
          %p246 = pneg %p152
        $region30: #{tpu_custom_call.1} parent=11 // pred_check_branch
          %248 = sbr.rel (%p246) target = $region32
        $region31: #{tpu_custom_call.1} parent=11 // pred_region
          %s250 = ssub.s32 4096, 4096
          %251 = vsyncadd [#allocation9], %s250
          %s252 = sshll.u32 [#allocation8], 4
          %s253 = int_to_ptr.vmem [resolvable:$true] %s252
          %258 = dma.hbm_to_vmem [thread:$0]  %s5, 4096, %s253, [#allocation9], 128, 128, 8
        $region32: #{tpu_custom_call.1} parent=11 // pred_fallthru
          _
        // Predicated region
        $region33: #{tpu_custom_call.1} parent=11 // pred_check
          %p259 = pneg %p173
        $region34: #{tpu_custom_call.1} parent=11 // pred_check_branch
          %261 = sbr.rel (%p259) target = $region36
        $region35: #{tpu_custom_call.1} parent=11 // pred_region
          _
        $region36: #{tpu_custom_call.1} parent=11 // pred_fallthru
          _
      $region12: #{tpu_custom_call.1} parent=5 // pred_fallthru
        _
      %p262 = scmp.lt.s32.totalorder %s21, 2
      // Predicated region
      $region37: #{tpu_custom_call.1} parent=5 // pred_check
        %p263 = pneg %p262
      $region38: #{tpu_custom_call.1} parent=5 // pred_check_branch
        %265 = sbr.rel (%p263) target = $region40
      $region39: #{tpu_custom_call.1} parent=5 // pred_region
        // Predicated region
        $region41: #{tpu_custom_call.1} parent=39 // pred_check
          %p266 = pneg %p41
        $region42: #{tpu_custom_call.1} parent=39 // pred_check_branch
          %268 = sbr.rel (%p266) target = $region44
        $region43: #{tpu_custom_call.1} parent=39 // pred_region
          %s269 = sand.u32 %s31, 1
          %s270 = scalar_lea.sflag [#allocation3], %s269
          %s271 = sand.u32 %s31, 1
          %s272 = smul.addr %s271, 256
          %s273 = scalar_lea.vmem [#allocation2], %s272
          %s274 = smul.u32 16, %s21
          %s276 = ssub.s32 4096, 4096
          %277 = vsyncadd %s270, %s276
          %s278 = smul.addr %s274, 2
          %s279 = smul.addr %s278, 128
          %s280 = scalar_lea.hbm %s0, %s279
          %s281 = sshll.u32 %s273, 4
          %s282 = int_to_ptr.vmem [resolvable:$true] %s281
          %287 = dma.hbm_to_vmem [thread:$0]  %s280, 4096, %s282, %s270, 256, 256, 16
        $region44: #{tpu_custom_call.1} parent=39 // pred_fallthru
          _
      $region40: #{tpu_custom_call.1} parent=5 // pred_fallthru
        _
      %p288 = scmp.le.s32.totalorder 1, %s21
      %p289 = scmp.lt.s32.totalorder %s21, 3
      %p290 = pnand %p288, %p289
      %p291 = pneg %p290
      // Predicated region
      $region45: #{tpu_custom_call.1} parent=5 // pred_check
        _
      $region46: #{tpu_custom_call.1} parent=5 // pred_check_branch
        %293 = sbr.rel (%p290) target = $region48
      $region47: #{tpu_custom_call.1} parent=5 // pred_region
        %s294 = ssub.s32 %s21, 1
        %s295 = sand.u32 %s34, 1
        %s296 = scalar_lea.sflag [#allocation3], %s295
        %s297 = sand.u32 %s34, 1
        %s298 = smul.addr %s297, 256
        %s299 = scalar_lea.vmem [#allocation2], %s298
        // Predicated region
        $region49: #{tpu_custom_call.1} parent=47 // pred_check
          %p300 = pneg %p47
        $region50: #{tpu_custom_call.1} parent=47 // pred_check_branch
          %302 = sbr.rel (%p300) target = $region52
        $region51: #{tpu_custom_call.1} parent=47 // pred_region
          %303 = dma.done %s296, 4096
        $region52: #{tpu_custom_call.1} parent=47 // pred_fallthru
          _
        // Predicated region
        $region53: #{tpu_custom_call.1} parent=47 // pred_check
          %p304 = pneg %p68
        $region54: #{tpu_custom_call.1} parent=47 // pred_check_branch
          %306 = sbr.rel (%p304) target = $region56
        $region55: #{tpu_custom_call.1} parent=47 // pred_region
          %307 = dma.done [#allocation6], 4096
        $region56: #{tpu_custom_call.1} parent=47 // pred_fallthru
          _
        // Predicated region
        $region57: #{tpu_custom_call.1} parent=47 // pred_check
          %p308 = pneg %p110
        $region58: #{tpu_custom_call.1} parent=47 // pred_check_branch
          %310 = sbr.rel (%p308) target = $region60
        $region59: #{tpu_custom_call.1} parent=47 // pred_region
          %311 = dma.done [#allocation6], 4096
        $region60: #{tpu_custom_call.1} parent=47 // pred_fallthru
          _
        // Predicated region
        $region61: #{tpu_custom_call.1} parent=47 // pred_check
          %p312 = pneg %p152
        $region62: #{tpu_custom_call.1} parent=47 // pred_check_branch
          %314 = sbr.rel (%p312) target = $region64
        $region63: #{tpu_custom_call.1} parent=47 // pred_region
          %315 = dma.done [#allocation9], 4096
        $region64: #{tpu_custom_call.1} parent=47 // pred_fallthru
          _
        %s316 = sand.u32 %s34, 1
        %s317 = scalar_lea.sflag [#allocation3], %s316
        %s318 = sand.u32 %s34, 1
        %s319 = smul.addr %s318, 256
        %s320 = scalar_lea.vmem [#allocation2], %s319
        %p321 = pneg %p47
        %p322 = pneg %p44
        %p323 = pneg %p68
        %p324 = pneg %p65
        %p325 = pneg %p89
        %p326 = pneg %p86
        %p327 = pneg %p110
        %p328 = pneg %p107
        %p329 = pneg %p131
        %p330 = pneg %p128
        %p331 = pneg %p152
        %p332 = pneg %p149
        %p333 = pneg %p173
        %p334 = pneg %p170
        %p335 = pneg %p199
        %p336 = pneg %p196
        %s337 = sand.u32 %s186, 1
        %s338 = scalar_lea.sflag [#allocation4], %s337
        %s339 = sand.u32 %s186, 1
        %s340 = smul.addr %s339, 256
        %s341 = scalar_lea.vmem [#allocation10], %s340
        %s342 = smul.u32 16, %s26
        %s343 = smul.u32 16, %s26
        %v344 = vld [vmem:[%s299] sm:$0xff]
        %v345 = vld [vmem:[%s299 + $0x8] sm:$0xff]
        %v346 = vld [vmem:[%s299 + $0x10] sm:$0xff]
        %v347 = vld [vmem:[%s299 + $0x18] sm:$0xff]
        %v348 = vld [vmem:[%s299 + $0x20] sm:$0xff]
        %v349 = vld [vmem:[%s299 + $0x28] sm:$0xff]
        %v350 = vld [vmem:[%s299 + $0x30] sm:$0xff]
        %v351 = vld [vmem:[%s299 + $0x38] sm:$0xff]
        %v352 = vld [vmem:[%s299 + $0x40] sm:$0xff]
        %v353 = vld [vmem:[%s299 + $0x48] sm:$0xff]
        %v354 = vld [vmem:[%s299 + $0x50] sm:$0xff]
        %v355 = vld [vmem:[%s299 + $0x58] sm:$0xff]
        %v356 = vld [vmem:[%s299 + $0x60] sm:$0xff]
        %v357 = vld [vmem:[%s299 + $0x68] sm:$0xff]
        %v358 = vld [vmem:[%s299 + $0x70] sm:$0xff]
        %v359 = vld [vmem:[%s299 + $0x78] sm:$0xff]
        %v360 = vld [vmem:[%s299 + $0x80] sm:$0xff]
        %v361 = vld [vmem:[%s299 + $0x88] sm:$0xff]
        %v362 = vld [vmem:[%s299 + $0x90] sm:$0xff]
        %v363 = vld [vmem:[%s299 + $0x98] sm:$0xff]
        %v364 = vld [vmem:[%s299 + $0xa0] sm:$0xff]
        %v365 = vld [vmem:[%s299 + $0xa8] sm:$0xff]
        %v366 = vld [vmem:[%s299 + $0xb0] sm:$0xff]
        %v367 = vld [vmem:[%s299 + $0xb8] sm:$0xff]
        %v368 = vld [vmem:[%s299 + $0xc0] sm:$0xff]
        %v369 = vld [vmem:[%s299 + $0xc8] sm:$0xff]
        %v370 = vld [vmem:[%s299 + $0xd0] sm:$0xff]
        %v371 = vld [vmem:[%s299 + $0xd8] sm:$0xff]
        %v372 = vld [vmem:[%s299 + $0xe0] sm:$0xff]
        %v373 = vld [vmem:[%s299 + $0xe8] sm:$0xff]
        %v374 = vld [vmem:[%s299 + $0xf0] sm:$0xff]
        %v375 = vld [vmem:[%s299 + $0xf8] sm:$0xff]
        %v376 = vpack.c.bf16 %v346, %v344
        %v377 = vpack.c.bf16 %v347, %v345
        %v378 = vpack.c.bf16 %v350, %v348
        %v379 = vpack.c.bf16 %v351, %v349
        %v380 = vpack.c.bf16 %v354, %v352
        %v381 = vpack.c.bf16 %v355, %v353
        %v382 = vpack.c.bf16 %v358, %v356
        %v383 = vpack.c.bf16 %v359, %v357
        %v384 = vpack.c.bf16 %v362, %v360
        %v385 = vpack.c.bf16 %v363, %v361
        %v386 = vpack.c.bf16 %v366, %v364
        %v387 = vpack.c.bf16 %v367, %v365
        %v388 = vpack.c.bf16 %v370, %v368
        %v389 = vpack.c.bf16 %v371, %v369
        %v390 = vpack.c.bf16 %v374, %v372
        %v391 = vpack.c.bf16 %v375, %v373
        %v392 = vld [vmem:[#allocation5] sm:$0xff]
        %v393 = vld [vmem:[#allocation5 + $0x8] sm:$0xff]
        %v394 = vld [vmem:[#allocation5 + $0x10] sm:$0xff]
        %v395 = vld [vmem:[#allocation5 + $0x18] sm:$0xff]
        %v396 = vld [vmem:[#allocation5 + $0x20] sm:$0xff]
        %v397 = vld [vmem:[#allocation5 + $0x28] sm:$0xff]
        %v398 = vld [vmem:[#allocation5 + $0x30] sm:$0xff]
        %v399 = vld [vmem:[#allocation5 + $0x38] sm:$0xff]
        %v400 = vld [vmem:[#allocation5 + $0x40] sm:$0xff]
        %v401 = vld [vmem:[#allocation5 + $0x48] sm:$0xff]
        %v402 = vld [vmem:[#allocation5 + $0x50] sm:$0xff]
        %v403 = vld [vmem:[#allocation5 + $0x58] sm:$0xff]
        %v404 = vld [vmem:[#allocation5 + $0x60] sm:$0xff]
        %v405 = vld [vmem:[#allocation5 + $0x68] sm:$0xff]
        %v406 = vld [vmem:[#allocation5 + $0x70] sm:$0xff]
        %v407 = vld [vmem:[#allocation5 + $0x78] sm:$0xff]
        %v408 = vld [vmem:[#allocation5 + $0x80] sm:$0xff]
        %v409 = vld [vmem:[#allocation5 + $0x88] sm:$0xff]
        %v410 = vld [vmem:[#allocation5 + $0x90] sm:$0xff]
        %v411 = vld [vmem:[#allocation5 + $0x98] sm:$0xff]
        %v412 = vld [vmem:[#allocation5 + $0xa0] sm:$0xff]
        %v413 = vld [vmem:[#allocation5 + $0xa8] sm:$0xff]
        %v414 = vld [vmem:[#allocation5 + $0xb0] sm:$0xff]
        %v415 = vld [vmem:[#allocation5 + $0xb8] sm:$0xff]
        %v416 = vld [vmem:[#allocation5 + $0xc0] sm:$0xff]
        %v417 = vld [vmem:[#allocation5 + $0xc8] sm:$0xff]
        %v418 = vld [vmem:[#allocation5 + $0xd0] sm:$0xff]
        %v419 = vld [vmem:[#allocation5 + $0xd8] sm:$0xff]
        %v420 = vld [vmem:[#allocation5 + $0xe0] sm:$0xff]
        %v421 = vld [vmem:[#allocation5 + $0xe8] sm:$0xff]
        %v422 = vld [vmem:[#allocation5 + $0xf0] sm:$0xff]
        %v423 = vld [vmem:[#allocation5 + $0xf8] sm:$0xff]
        %v424 = vld [vmem:[%s2] sm:$0x3]
        %v426 = vlaneseq
        %v427 = vshrl.u32 %v426, 7
        %v428 = vsub.s32 0, %v427
        %v429 = vrot.slane %v424, %v428
        %v430 = vlaneseq
        %v431 = vshrl.u32 %v430, 7
        %v432 = vsub.s32 1, %v431
        %v433 = vrot.slane %v424, %v432
        %v468 = vunpack.c.l.b16 %v392
        %v469 = vunpack.c.h.b16 %v392
        %v470 = vunpack.c.l.b16 %v393
        %v471 = vunpack.c.h.b16 %v393
        %v472 = vunpack.c.l.b16 %v394
        %v473 = vunpack.c.h.b16 %v394
        %v474 = vunpack.c.l.b16 %v395
        %v475 = vunpack.c.h.b16 %v395
        %v476 = vunpack.c.l.b16 %v396
        %v477 = vunpack.c.h.b16 %v396
        %v478 = vunpack.c.l.b16 %v397
        %v479 = vunpack.c.h.b16 %v397
        %v480 = vunpack.c.l.b16 %v398
        %v481 = vunpack.c.h.b16 %v398
        %v482 = vunpack.c.l.b16 %v399
        %v483 = vunpack.c.h.b16 %v399
        %v484 = vunpack.c.l.b16 %v400
        %v485 = vunpack.c.h.b16 %v400
        %v486 = vunpack.c.l.b16 %v401
        %v487 = vunpack.c.h.b16 %v401
        %v488 = vunpack.c.l.b16 %v402
        %v489 = vunpack.c.h.b16 %v402
        %v490 = vunpack.c.l.b16 %v403
        %v491 = vunpack.c.h.b16 %v403
        %v492 = vunpack.c.l.b16 %v404
        %v493 = vunpack.c.h.b16 %v404
        %v494 = vunpack.c.l.b16 %v405
        %v495 = vunpack.c.h.b16 %v405
        %v496 = vunpack.c.l.b16 %v406
        %v497 = vunpack.c.h.b16 %v406
        %v498 = vunpack.c.l.b16 %v407
        %v499 = vunpack.c.h.b16 %v407
        %v500 = vunpack.c.l.b16 %v408
        %v501 = vunpack.c.h.b16 %v408
        %v502 = vunpack.c.l.b16 %v409
        %v503 = vunpack.c.h.b16 %v409
        %v504 = vunpack.c.l.b16 %v410
        %v505 = vunpack.c.h.b16 %v410
        %v506 = vunpack.c.l.b16 %v411
        %v507 = vunpack.c.h.b16 %v411
        %v508 = vunpack.c.l.b16 %v412
        %v509 = vunpack.c.h.b16 %v412
        %v510 = vunpack.c.l.b16 %v413
        %v511 = vunpack.c.h.b16 %v413
        %v512 = vunpack.c.l.b16 %v414
        %v513 = vunpack.c.h.b16 %v414
        %v514 = vunpack.c.l.b16 %v415
        %v515 = vunpack.c.h.b16 %v415
        %v516 = vunpack.c.l.b16 %v416
        %v517 = vunpack.c.h.b16 %v416
        %v518 = vunpack.c.l.b16 %v417
        %v519 = vunpack.c.h.b16 %v417
        %v520 = vunpack.c.l.b16 %v418
        %v521 = vunpack.c.h.b16 %v418
        %v522 = vunpack.c.l.b16 %v419
        %v523 = vunpack.c.h.b16 %v419
        %v524 = vunpack.c.l.b16 %v420
        %v525 = vunpack.c.h.b16 %v420
        %v526 = vunpack.c.l.b16 %v421
        %v527 = vunpack.c.h.b16 %v421
        %v528 = vunpack.c.l.b16 %v422
        %v529 = vunpack.c.h.b16 %v422
        %v530 = vunpack.c.l.b16 %v423
        %v531 = vunpack.c.h.b16 %v423
        %v532 = vpack.c.b16 %v470, %v468
        %v533 = vpack.c.b16 %v471, %v469
        %v534 = vpack.c.b16 %v474, %v472
        %v535 = vpack.c.b16 %v475, %v473
        %v536 = vpack.c.b16 %v478, %v476
        %v537 = vpack.c.b16 %v479, %v477
        %v538 = vpack.c.b16 %v482, %v480
        %v539 = vpack.c.b16 %v483, %v481
        %v540 = vpack.c.b16 %v486, %v484
        %v541 = vpack.c.b16 %v487, %v485
        %v542 = vpack.c.b16 %v490, %v488
        %v543 = vpack.c.b16 %v491, %v489
        %v544 = vpack.c.b16 %v494, %v492
        %v545 = vpack.c.b16 %v495, %v493
        %v546 = vpack.c.b16 %v498, %v496
        %v547 = vpack.c.b16 %v499, %v497
        %v548 = vpack.c.b16 %v502, %v500
        %v549 = vpack.c.b16 %v503, %v501
        %v550 = vpack.c.b16 %v506, %v504
        %v551 = vpack.c.b16 %v507, %v505
        %v552 = vpack.c.b16 %v510, %v508
        %v553 = vpack.c.b16 %v511, %v509
        %v554 = vpack.c.b16 %v514, %v512
        %v555 = vpack.c.b16 %v515, %v513
        %v556 = vpack.c.b16 %v518, %v516
        %v557 = vpack.c.b16 %v519, %v517
        %v558 = vpack.c.b16 %v522, %v520
        %v559 = vpack.c.b16 %v523, %v521
        %v560 = vpack.c.b16 %v526, %v524
        %v561 = vpack.c.b16 %v527, %v525
        %v562 = vpack.c.b16 %v530, %v528
        %v563 = vpack.c.b16 %v531, %v529
        %596 = vmatprep.subr.bf16.mxu0 %v547
        %597 = vmatpush1.bf16.msra.mxu0 %v546
        %598 = vmatprep.subr.bf16.mxu0 %v545
        %599 = vmatpush1.bf16.msra.mxu0 %v544
        %600 = vmatprep.subr.bf16.mxu0 %v543
        %601 = vmatpush1.bf16.msra.mxu0 %v542
        %602 = vmatprep.subr.bf16.mxu0 %v541
        %603 = vmatpush1.bf16.msra.mxu0 %v540
        %604 = vmatprep.subr.bf16.mxu0 %v539
        %605 = vmatpush1.bf16.msra.mxu0 %v538
        %606 = vmatprep.subr.bf16.mxu0 %v537
        %607 = vmatpush1.bf16.msra.mxu0 %v536
        %608 = vmatprep.subr.bf16.mxu0 %v535
        %609 = vmatpush1.bf16.msra.mxu0 %v534
        %610 = vmatprep.subr.bf16.mxu0 %v533
        %611 = vmatpush1.bf16.msra.mxu0 %v532
        %612 = vmatprep.subr.bf16.mxu0 %v563
        %613 = vmatpush2.bf16.msra.mxu0 %v562
        %614 = vmatprep.subr.bf16.mxu0 %v561
        %615 = vmatpush2.bf16.msra.mxu0 %v560
        %616 = vmatprep.subr.bf16.mxu0 %v559
        %617 = vmatpush2.bf16.msra.mxu0 %v558
        %618 = vmatprep.subr.bf16.mxu0 %v557
        %619 = vmatpush2.bf16.msra.mxu0 %v556
        %620 = vmatprep.subr.bf16.mxu0 %v555
        %621 = vmatpush2.bf16.msra.mxu0 %v554
        %622 = vmatprep.subr.bf16.mxu0 %v553
        %623 = vmatpush2.bf16.msra.mxu0 %v552
        %624 = vmatprep.subr.bf16.mxu0 %v551
        %625 = vmatpush2.bf16.msra.mxu0 %v550
        %626 = vmatprep.subr.bf16.mxu0 %v549
        %627 = vmatpush2.bf16.msra.mxu0 %v548
        %628 = vmatprep.mubr.bf16.mxu0 %v377
        %629 = vmatmul.mubr.bf16.gmra.mxu0 %v376
        %v630 = vpop.f32.mrf.mxu0
        %v631 = vadd.f32 %v429, %v630
        %v632 = vpop.f32.mrf.mxu0
        %v633 = vadd.f32 %v433, %v632
        %v634 = vpop.f32.mrf.mxu0
        %v635 = vadd.f32 %v429, %v634
        %v636 = vpop.f32.mrf.mxu0
        %v637 = vadd.f32 %v433, %v636
        %638 = vmatprep.mubr.bf16.mxu0 %v379
        %639 = vmatmul.mubr.bf16.gmra.mxu0 %v378
        %v640 = vpop.f32.mrf.mxu0
        %v641 = vadd.f32 %v429, %v640
        %v642 = vpop.f32.mrf.mxu0
        %v643 = vadd.f32 %v433, %v642
        %v644 = vpop.f32.mrf.mxu0
        %v645 = vadd.f32 %v429, %v644
        %v646 = vpop.f32.mrf.mxu0
        %v647 = vadd.f32 %v433, %v646
        %648 = vmatprep.mubr.bf16.mxu0 %v381
        %649 = vmatmul.mubr.bf16.gmra.mxu0 %v380
        %v650 = vpop.f32.mrf.mxu0
        %v651 = vadd.f32 %v429, %v650
        %v652 = vpop.f32.mrf.mxu0
        %v653 = vadd.f32 %v433, %v652
        %v654 = vpop.f32.mrf.mxu0
        %v655 = vadd.f32 %v429, %v654
        %v656 = vpop.f32.mrf.mxu0
        %v657 = vadd.f32 %v433, %v656
        %658 = vmatprep.mubr.bf16.mxu0 %v383
        %659 = vmatmul.mubr.bf16.gmra.mxu0 %v382
        %v660 = vpop.f32.mrf.mxu0
        %v661 = vadd.f32 %v429, %v660
        %v662 = vpop.f32.mrf.mxu0
        %v663 = vadd.f32 %v433, %v662
        %v664 = vpop.f32.mrf.mxu0
        %v665 = vadd.f32 %v429, %v664
        %v666 = vpop.f32.mrf.mxu0
        %v667 = vadd.f32 %v433, %v666
        %668 = vmatprep.mubr.bf16.mxu0 %v385
        %669 = vmatmul.mubr.bf16.gmra.mxu0 %v384
        %v670 = vpop.f32.mrf.mxu0
        %v671 = vadd.f32 %v429, %v670
        %v672 = vpop.f32.mrf.mxu0
        %v673 = vadd.f32 %v433, %v672
        %v674 = vpop.f32.mrf.mxu0
        %v675 = vadd.f32 %v429, %v674
        %v676 = vpop.f32.mrf.mxu0
        %v677 = vadd.f32 %v433, %v676
        %678 = vmatprep.mubr.bf16.mxu0 %v387
        %679 = vmatmul.mubr.bf16.gmra.mxu0 %v386
        %v680 = vpop.f32.mrf.mxu0
        %v681 = vadd.f32 %v429, %v680
        %v682 = vpop.f32.mrf.mxu0
        %v683 = vadd.f32 %v433, %v682
        %v684 = vpop.f32.mrf.mxu0
        %v685 = vadd.f32 %v429, %v684
        %v686 = vpop.f32.mrf.mxu0
        %v687 = vadd.f32 %v433, %v686
        %688 = vmatprep.mubr.bf16.mxu0 %v389
        %689 = vmatmul.mubr.bf16.gmra.mxu0 %v388
        %v690 = vpop.f32.mrf.mxu0
        %v691 = vadd.f32 %v429, %v690
        %v692 = vpop.f32.mrf.mxu0
        %v693 = vadd.f32 %v433, %v692
        %v694 = vpop.f32.mrf.mxu0
        %v695 = vadd.f32 %v429, %v694
        %v696 = vpop.f32.mrf.mxu0
        %v697 = vadd.f32 %v433, %v696
        %698 = vmatprep.mubr.bf16.mxu0 %v391
        %699 = vmatmul.mubr.bf16.gmra.mxu0 %v390
        %v700 = vpop.f32.mrf.mxu0
        %v701 = vadd.f32 %v429, %v700
        %v702 = vpop.f32.mrf.mxu0
        %v703 = vadd.f32 %v433, %v702
        %v704 = vpop.f32.mrf.mxu0
        %v705 = vadd.f32 %v429, %v704
        %v706 = vpop.f32.mrf.mxu0
        %v707 = vadd.f32 %v433, %v706
        %708 = vdwg.mxu0
        %vm709 = vcmp.ge.f32.partialorder %v631, 0.0
        %vm710 = vcmp.ge.f32.partialorder %v633, 0.0
        %vm711 = vcmp.ge.f32.partialorder %v635, 0.0
        %vm712 = vcmp.ge.f32.partialorder %v637, 0.0
        %vm713 = vcmp.ge.f32.partialorder %v641, 0.0
        %vm714 = vcmp.ge.f32.partialorder %v643, 0.0
        %vm715 = vcmp.ge.f32.partialorder %v645, 0.0
        %vm716 = vcmp.ge.f32.partialorder %v647, 0.0
        %vm717 = vcmp.ge.f32.partialorder %v651, 0.0
        %vm718 = vcmp.ge.f32.partialorder %v653, 0.0
        %vm719 = vcmp.ge.f32.partialorder %v655, 0.0
        %vm720 = vcmp.ge.f32.partialorder %v657, 0.0
        %vm721 = vcmp.ge.f32.partialorder %v661, 0.0
        %vm722 = vcmp.ge.f32.partialorder %v663, 0.0
        %vm723 = vcmp.ge.f32.partialorder %v665, 0.0
        %vm724 = vcmp.ge.f32.partialorder %v667, 0.0
        %vm725 = vcmp.ge.f32.partialorder %v671, 0.0
        %vm726 = vcmp.ge.f32.partialorder %v673, 0.0
        %vm727 = vcmp.ge.f32.partialorder %v675, 0.0
        %vm728 = vcmp.ge.f32.partialorder %v677, 0.0
        %vm729 = vcmp.ge.f32.partialorder %v681, 0.0
        %vm730 = vcmp.ge.f32.partialorder %v683, 0.0
        %vm731 = vcmp.ge.f32.partialorder %v685, 0.0
        %vm732 = vcmp.ge.f32.partialorder %v687, 0.0
        %vm733 = vcmp.ge.f32.partialorder %v691, 0.0
        %vm734 = vcmp.ge.f32.partialorder %v693, 0.0
        %vm735 = vcmp.ge.f32.partialorder %v695, 0.0
        %vm736 = vcmp.ge.f32.partialorder %v697, 0.0
        %vm737 = vcmp.ge.f32.partialorder %v701, 0.0
        %vm738 = vcmp.ge.f32.partialorder %v703, 0.0
        %vm739 = vcmp.ge.f32.partialorder %v705, 0.0
        %vm740 = vcmp.ge.f32.partialorder %v707, 0.0
        %v741 = vmul.f32 %v631, 0.2
        %v742 = vmul.f32 %v633, 0.2
        %v743 = vmul.f32 %v635, 0.2
        %v744 = vmul.f32 %v637, 0.2
        %v745 = vmul.f32 %v641, 0.2
        %v746 = vmul.f32 %v643, 0.2
        %v747 = vmul.f32 %v645, 0.2
        %v748 = vmul.f32 %v647, 0.2
        %v749 = vmul.f32 %v651, 0.2
        %v750 = vmul.f32 %v653, 0.2
        %v751 = vmul.f32 %v655, 0.2
        %v752 = vmul.f32 %v657, 0.2
        %v753 = vmul.f32 %v661, 0.2
        %v754 = vmul.f32 %v663, 0.2
        %v755 = vmul.f32 %v665, 0.2
        %v756 = vmul.f32 %v667, 0.2
        %v757 = vmul.f32 %v671, 0.2
        %v758 = vmul.f32 %v673, 0.2
        %v759 = vmul.f32 %v675, 0.2
        %v760 = vmul.f32 %v677, 0.2
        %v761 = vmul.f32 %v681, 0.2
        %v762 = vmul.f32 %v683, 0.2
        %v763 = vmul.f32 %v685, 0.2
        %v764 = vmul.f32 %v687, 0.2
        %v765 = vmul.f32 %v691, 0.2
        %v766 = vmul.f32 %v693, 0.2
        %v767 = vmul.f32 %v695, 0.2
        %v768 = vmul.f32 %v697, 0.2
        %v769 = vmul.f32 %v701, 0.2
        %v770 = vmul.f32 %v703, 0.2
        %v771 = vmul.f32 %v705, 0.2
        %v772 = vmul.f32 %v707, 0.2
        %v773 = vsel %vm709, %v631, %v741
        %v774 = vsel %vm710, %v633, %v742
        %v775 = vsel %vm711, %v635, %v743
        %v776 = vsel %vm712, %v637, %v744
        %v777 = vsel %vm713, %v641, %v745
        %v778 = vsel %vm714, %v643, %v746
        %v779 = vsel %vm715, %v645, %v747
        %v780 = vsel %vm716, %v647, %v748
        %v781 = vsel %vm717, %v651, %v749
        %v782 = vsel %vm718, %v653, %v750
        %v783 = vsel %vm719, %v655, %v751
        %v784 = vsel %vm720, %v657, %v752
        %v785 = vsel %vm721, %v661, %v753
        %v786 = vsel %vm722, %v663, %v754
        %v787 = vsel %vm723, %v665, %v755
        %v788 = vsel %vm724, %v667, %v756
        %v789 = vsel %vm725, %v671, %v757
        %v790 = vsel %vm726, %v673, %v758
        %v791 = vsel %vm727, %v675, %v759
        %v792 = vsel %vm728, %v677, %v760
        %v793 = vsel %vm729, %v681, %v761
        %v794 = vsel %vm730, %v683, %v762
        %v795 = vsel %vm731, %v685, %v763
        %v796 = vsel %vm732, %v687, %v764
        %v797 = vsel %vm733, %v691, %v765
        %v798 = vsel %vm734, %v693, %v766
        %v799 = vsel %vm735, %v695, %v767
        %v800 = vsel %vm736, %v697, %v768
        %v801 = vsel %vm737, %v701, %v769
        %v802 = vsel %vm738, %v703, %v770
        %v803 = vsel %vm739, %v705, %v771
        %v804 = vsel %vm740, %v707, %v772
        %v805 = vpack.c.bf16 %v775, %v773
        %v806 = vpack.c.bf16 %v776, %v774
        %v807 = vpack.c.bf16 %v779, %v777
        %v808 = vpack.c.bf16 %v780, %v778
        %v809 = vpack.c.bf16 %v783, %v781
        %v810 = vpack.c.bf16 %v784, %v782
        %v811 = vpack.c.bf16 %v787, %v785
        %v812 = vpack.c.bf16 %v788, %v786
        %v813 = vpack.c.bf16 %v791, %v789
        %v814 = vpack.c.bf16 %v792, %v790
        %v815 = vpack.c.bf16 %v795, %v793
        %v816 = vpack.c.bf16 %v796, %v794
        %v817 = vpack.c.bf16 %v799, %v797
        %v818 = vpack.c.bf16 %v800, %v798
        %v819 = vpack.c.bf16 %v803, %v801
        %v820 = vpack.c.bf16 %v804, %v802
        %v821 = vld [vmem:[#allocation7] sm:$0xff]
        %v822 = vld [vmem:[#allocation7 + $0x8] sm:$0xff]
        %v823 = vld [vmem:[#allocation7 + $0x10] sm:$0xff]
        %v824 = vld [vmem:[#allocation7 + $0x18] sm:$0xff]
        %v825 = vld [vmem:[#allocation7 + $0x20] sm:$0xff]
        %v826 = vld [vmem:[#allocation7 + $0x28] sm:$0xff]
        %v827 = vld [vmem:[#allocation7 + $0x30] sm:$0xff]
        %v828 = vld [vmem:[#allocation7 + $0x38] sm:$0xff]
        %v829 = vld [vmem:[#allocation7 + $0x40] sm:$0xff]
        %v830 = vld [vmem:[#allocation7 + $0x48] sm:$0xff]
        %v831 = vld [vmem:[#allocation7 + $0x50] sm:$0xff]
        %v832 = vld [vmem:[#allocation7 + $0x58] sm:$0xff]
        %v833 = vld [vmem:[#allocation7 + $0x60] sm:$0xff]
        %v834 = vld [vmem:[#allocation7 + $0x68] sm:$0xff]
        %v835 = vld [vmem:[#allocation7 + $0x70] sm:$0xff]
        %v836 = vld [vmem:[#allocation7 + $0x78] sm:$0xff]
        %v837 = vld [vmem:[#allocation7 + $0x80] sm:$0xff]
        %v838 = vld [vmem:[#allocation7 + $0x88] sm:$0xff]
        %v839 = vld [vmem:[#allocation7 + $0x90] sm:$0xff]
        %v840 = vld [vmem:[#allocation7 + $0x98] sm:$0xff]
        %v841 = vld [vmem:[#allocation7 + $0xa0] sm:$0xff]
        %v842 = vld [vmem:[#allocation7 + $0xa8] sm:$0xff]
        %v843 = vld [vmem:[#allocation7 + $0xb0] sm:$0xff]
        %v844 = vld [vmem:[#allocation7 + $0xb8] sm:$0xff]
        %v845 = vld [vmem:[#allocation7 + $0xc0] sm:$0xff]
        %v846 = vld [vmem:[#allocation7 + $0xc8] sm:$0xff]
        %v847 = vld [vmem:[#allocation7 + $0xd0] sm:$0xff]
        %v848 = vld [vmem:[#allocation7 + $0xd8] sm:$0xff]
        %v849 = vld [vmem:[#allocation7 + $0xe0] sm:$0xff]
        %v850 = vld [vmem:[#allocation7 + $0xe8] sm:$0xff]
        %v851 = vld [vmem:[#allocation7 + $0xf0] sm:$0xff]
        %v852 = vld [vmem:[#allocation7 + $0xf8] sm:$0xff]
        %v853 = vld [vmem:[%s4] sm:$0x3]
        %v855 = vlaneseq
        %v856 = vshrl.u32 %v855, 7
        %v857 = vsub.s32 0, %v856
        %v858 = vrot.slane %v853, %v857
        %v859 = vlaneseq
        %v860 = vshrl.u32 %v859, 7
        %v861 = vsub.s32 1, %v860
        %v862 = vrot.slane %v853, %v861
        %v897 = vunpack.c.l.b16 %v821
        %v898 = vunpack.c.h.b16 %v821
        %v899 = vunpack.c.l.b16 %v822
        %v900 = vunpack.c.h.b16 %v822
        %v901 = vunpack.c.l.b16 %v823
        %v902 = vunpack.c.h.b16 %v823
        %v903 = vunpack.c.l.b16 %v824
        %v904 = vunpack.c.h.b16 %v824
        %v905 = vunpack.c.l.b16 %v825
        %v906 = vunpack.c.h.b16 %v825
        %v907 = vunpack.c.l.b16 %v826
        %v908 = vunpack.c.h.b16 %v826
        %v909 = vunpack.c.l.b16 %v827
        %v910 = vunpack.c.h.b16 %v827
        %v911 = vunpack.c.l.b16 %v828
        %v912 = vunpack.c.h.b16 %v828
        %v913 = vunpack.c.l.b16 %v829
        %v914 = vunpack.c.h.b16 %v829
        %v915 = vunpack.c.l.b16 %v830
        %v916 = vunpack.c.h.b16 %v830
        %v917 = vunpack.c.l.b16 %v831
        %v918 = vunpack.c.h.b16 %v831
        %v919 = vunpack.c.l.b16 %v832
        %v920 = vunpack.c.h.b16 %v832
        %v921 = vunpack.c.l.b16 %v833
        %v922 = vunpack.c.h.b16 %v833
        %v923 = vunpack.c.l.b16 %v834
        %v924 = vunpack.c.h.b16 %v834
        %v925 = vunpack.c.l.b16 %v835
        %v926 = vunpack.c.h.b16 %v835
        %v927 = vunpack.c.l.b16 %v836
        %v928 = vunpack.c.h.b16 %v836
        %v929 = vunpack.c.l.b16 %v837
        %v930 = vunpack.c.h.b16 %v837
        %v931 = vunpack.c.l.b16 %v838
        %v932 = vunpack.c.h.b16 %v838
        %v933 = vunpack.c.l.b16 %v839
        %v934 = vunpack.c.h.b16 %v839
        %v935 = vunpack.c.l.b16 %v840
        %v936 = vunpack.c.h.b16 %v840
        %v937 = vunpack.c.l.b16 %v841
        %v938 = vunpack.c.h.b16 %v841
        %v939 = vunpack.c.l.b16 %v842
        %v940 = vunpack.c.h.b16 %v842
        %v941 = vunpack.c.l.b16 %v843
        %v942 = vunpack.c.h.b16 %v843
        %v943 = vunpack.c.l.b16 %v844
        %v944 = vunpack.c.h.b16 %v844
        %v945 = vunpack.c.l.b16 %v845
        %v946 = vunpack.c.h.b16 %v845
        %v947 = vunpack.c.l.b16 %v846
        %v948 = vunpack.c.h.b16 %v846
        %v949 = vunpack.c.l.b16 %v847
        %v950 = vunpack.c.h.b16 %v847
        %v951 = vunpack.c.l.b16 %v848
        %v952 = vunpack.c.h.b16 %v848
        %v953 = vunpack.c.l.b16 %v849
        %v954 = vunpack.c.h.b16 %v849
        %v955 = vunpack.c.l.b16 %v850
        %v956 = vunpack.c.h.b16 %v850
        %v957 = vunpack.c.l.b16 %v851
        %v958 = vunpack.c.h.b16 %v851
        %v959 = vunpack.c.l.b16 %v852
        %v960 = vunpack.c.h.b16 %v852
        %v961 = vpack.c.b16 %v899, %v897
        %v962 = vpack.c.b16 %v900, %v898
        %v963 = vpack.c.b16 %v903, %v901
        %v964 = vpack.c.b16 %v904, %v902
        %v965 = vpack.c.b16 %v907, %v905
        %v966 = vpack.c.b16 %v908, %v906
        %v967 = vpack.c.b16 %v911, %v909
        %v968 = vpack.c.b16 %v912, %v910
        %v969 = vpack.c.b16 %v915, %v913
        %v970 = vpack.c.b16 %v916, %v914
        %v971 = vpack.c.b16 %v919, %v917
        %v972 = vpack.c.b16 %v920, %v918
        %v973 = vpack.c.b16 %v923, %v921
        %v974 = vpack.c.b16 %v924, %v922
        %v975 = vpack.c.b16 %v927, %v925
        %v976 = vpack.c.b16 %v928, %v926
        %v977 = vpack.c.b16 %v931, %v929
        %v978 = vpack.c.b16 %v932, %v930
        %v979 = vpack.c.b16 %v935, %v933
        %v980 = vpack.c.b16 %v936, %v934
        %v981 = vpack.c.b16 %v939, %v937
        %v982 = vpack.c.b16 %v940, %v938
        %v983 = vpack.c.b16 %v943, %v941
        %v984 = vpack.c.b16 %v944, %v942
        %v985 = vpack.c.b16 %v947, %v945
        %v986 = vpack.c.b16 %v948, %v946
        %v987 = vpack.c.b16 %v951, %v949
        %v988 = vpack.c.b16 %v952, %v950
        %v989 = vpack.c.b16 %v955, %v953
        %v990 = vpack.c.b16 %v956, %v954
        %v991 = vpack.c.b16 %v959, %v957
        %v992 = vpack.c.b16 %v960, %v958
        %1025 = vmatprep.subr.bf16.mxu0 %v976
        %1026 = vmatpush1.bf16.msra.mxu0 %v975
        %1027 = vmatprep.subr.bf16.mxu0 %v974
        %1028 = vmatpush1.bf16.msra.mxu0 %v973
        %1029 = vmatprep.subr.bf16.mxu0 %v972
        %1030 = vmatpush1.bf16.msra.mxu0 %v971
        %1031 = vmatprep.subr.bf16.mxu0 %v970
        %1032 = vmatpush1.bf16.msra.mxu0 %v969
        %1033 = vmatprep.subr.bf16.mxu0 %v968
        %1034 = vmatpush1.bf16.msra.mxu0 %v967
        %1035 = vmatprep.subr.bf16.mxu0 %v966
        %1036 = vmatpush1.bf16.msra.mxu0 %v965
        %1037 = vmatprep.subr.bf16.mxu0 %v964
        %1038 = vmatpush1.bf16.msra.mxu0 %v963
        %1039 = vmatprep.subr.bf16.mxu0 %v962
        %1040 = vmatpush1.bf16.msra.mxu0 %v961
        %1041 = vmatprep.subr.bf16.mxu0 %v992
        %1042 = vmatpush2.bf16.msra.mxu0 %v991
        %1043 = vmatprep.subr.bf16.mxu0 %v990
        %1044 = vmatpush2.bf16.msra.mxu0 %v989
        %1045 = vmatprep.subr.bf16.mxu0 %v988
        %1046 = vmatpush2.bf16.msra.mxu0 %v987
        %1047 = vmatprep.subr.bf16.mxu0 %v986
        %1048 = vmatpush2.bf16.msra.mxu0 %v985
        %1049 = vmatprep.subr.bf16.mxu0 %v984
        %1050 = vmatpush2.bf16.msra.mxu0 %v983
        %1051 = vmatprep.subr.bf16.mxu0 %v982
        %1052 = vmatpush2.bf16.msra.mxu0 %v981
        %1053 = vmatprep.subr.bf16.mxu0 %v980
        %1054 = vmatpush2.bf16.msra.mxu0 %v979
        %1055 = vmatprep.subr.bf16.mxu0 %v978
        %1056 = vmatpush2.bf16.msra.mxu0 %v977
        %1057 = vmatprep.mubr.bf16.mxu0 %v806
        %1058 = vmatmul.mubr.bf16.gmra.mxu0 %v805
        %v1059 = vpop.f32.mrf.mxu0
        %v1060 = vadd.f32 %v858, %v1059
        %v1061 = vpop.f32.mrf.mxu0
        %v1062 = vadd.f32 %v862, %v1061
        %v1063 = vpop.f32.mrf.mxu0
        %v1064 = vadd.f32 %v858, %v1063
        %v1065 = vpop.f32.mrf.mxu0
        %v1066 = vadd.f32 %v862, %v1065
        %1067 = vmatprep.mubr.bf16.mxu0 %v808
        %1068 = vmatmul.mubr.bf16.gmra.mxu0 %v807
        %v1069 = vpop.f32.mrf.mxu0
        %v1070 = vadd.f32 %v858, %v1069
        %v1071 = vpop.f32.mrf.mxu0
        %v1072 = vadd.f32 %v862, %v1071
        %v1073 = vpop.f32.mrf.mxu0
        %v1074 = vadd.f32 %v858, %v1073
        %v1075 = vpop.f32.mrf.mxu0
        %v1076 = vadd.f32 %v862, %v1075
        %1077 = vmatprep.mubr.bf16.mxu0 %v810
        %1078 = vmatmul.mubr.bf16.gmra.mxu0 %v809
        %v1079 = vpop.f32.mrf.mxu0
        %v1080 = vadd.f32 %v858, %v1079
        %v1081 = vpop.f32.mrf.mxu0
        %v1082 = vadd.f32 %v862, %v1081
        %v1083 = vpop.f32.mrf.mxu0
        %v1084 = vadd.f32 %v858, %v1083
        %v1085 = vpop.f32.mrf.mxu0
        %v1086 = vadd.f32 %v862, %v1085
        %1087 = vmatprep.mubr.bf16.mxu0 %v812
        %1088 = vmatmul.mubr.bf16.gmra.mxu0 %v811
        %v1089 = vpop.f32.mrf.mxu0
        %v1090 = vadd.f32 %v858, %v1089
        %v1091 = vpop.f32.mrf.mxu0
        %v1092 = vadd.f32 %v862, %v1091
        %v1093 = vpop.f32.mrf.mxu0
        %v1094 = vadd.f32 %v858, %v1093
        %v1095 = vpop.f32.mrf.mxu0
        %v1096 = vadd.f32 %v862, %v1095
        %1097 = vmatprep.mubr.bf16.mxu0 %v814
        %1098 = vmatmul.mubr.bf16.gmra.mxu0 %v813
        %v1099 = vpop.f32.mrf.mxu0
        %v1100 = vadd.f32 %v858, %v1099
        %v1101 = vpop.f32.mrf.mxu0
        %v1102 = vadd.f32 %v862, %v1101
        %v1103 = vpop.f32.mrf.mxu0
        %v1104 = vadd.f32 %v858, %v1103
        %v1105 = vpop.f32.mrf.mxu0
        %v1106 = vadd.f32 %v862, %v1105
        %1107 = vmatprep.mubr.bf16.mxu0 %v816
        %1108 = vmatmul.mubr.bf16.gmra.mxu0 %v815
        %v1109 = vpop.f32.mrf.mxu0
        %v1110 = vadd.f32 %v858, %v1109
        %v1111 = vpop.f32.mrf.mxu0
        %v1112 = vadd.f32 %v862, %v1111
        %v1113 = vpop.f32.mrf.mxu0
        %v1114 = vadd.f32 %v858, %v1113
        %v1115 = vpop.f32.mrf.mxu0
        %v1116 = vadd.f32 %v862, %v1115
        %1117 = vmatprep.mubr.bf16.mxu0 %v818
        %1118 = vmatmul.mubr.bf16.gmra.mxu0 %v817
        %v1119 = vpop.f32.mrf.mxu0
        %v1120 = vadd.f32 %v858, %v1119
        %v1121 = vpop.f32.mrf.mxu0
        %v1122 = vadd.f32 %v862, %v1121
        %v1123 = vpop.f32.mrf.mxu0
        %v1124 = vadd.f32 %v858, %v1123
        %v1125 = vpop.f32.mrf.mxu0
        %v1126 = vadd.f32 %v862, %v1125
        %1127 = vmatprep.mubr.bf16.mxu0 %v820
        %1128 = vmatmul.mubr.bf16.gmra.mxu0 %v819
        %v1129 = vpop.f32.mrf.mxu0
        %v1130 = vadd.f32 %v858, %v1129
        %v1131 = vpop.f32.mrf.mxu0
        %v1132 = vadd.f32 %v862, %v1131
        %v1133 = vpop.f32.mrf.mxu0
        %v1134 = vadd.f32 %v858, %v1133
        %v1135 = vpop.f32.mrf.mxu0
        %v1136 = vadd.f32 %v862, %v1135
        %1137 = vdwg.mxu0
        %vm1138 = vcmp.ge.f32.partialorder %v1060, 0.0
        %vm1139 = vcmp.ge.f32.partialorder %v1062, 0.0
        %vm1140 = vcmp.ge.f32.partialorder %v1064, 0.0
        %vm1141 = vcmp.ge.f32.partialorder %v1066, 0.0
        %vm1142 = vcmp.ge.f32.partialorder %v1070, 0.0
        %vm1143 = vcmp.ge.f32.partialorder %v1072, 0.0
        %vm1144 = vcmp.ge.f32.partialorder %v1074, 0.0
        %vm1145 = vcmp.ge.f32.partialorder %v1076, 0.0
        %vm1146 = vcmp.ge.f32.partialorder %v1080, 0.0
        %vm1147 = vcmp.ge.f32.partialorder %v1082, 0.0
        %vm1148 = vcmp.ge.f32.partialorder %v1084, 0.0
        %vm1149 = vcmp.ge.f32.partialorder %v1086, 0.0
        %vm1150 = vcmp.ge.f32.partialorder %v1090, 0.0
        %vm1151 = vcmp.ge.f32.partialorder %v1092, 0.0
        %vm1152 = vcmp.ge.f32.partialorder %v1094, 0.0
        %vm1153 = vcmp.ge.f32.partialorder %v1096, 0.0
        %vm1154 = vcmp.ge.f32.partialorder %v1100, 0.0
        %vm1155 = vcmp.ge.f32.partialorder %v1102, 0.0
        %vm1156 = vcmp.ge.f32.partialorder %v1104, 0.0
        %vm1157 = vcmp.ge.f32.partialorder %v1106, 0.0
        %vm1158 = vcmp.ge.f32.partialorder %v1110, 0.0
        %vm1159 = vcmp.ge.f32.partialorder %v1112, 0.0
        %vm1160 = vcmp.ge.f32.partialorder %v1114, 0.0
        %vm1161 = vcmp.ge.f32.partialorder %v1116, 0.0
        %vm1162 = vcmp.ge.f32.partialorder %v1120, 0.0
        %vm1163 = vcmp.ge.f32.partialorder %v1122, 0.0
        %vm1164 = vcmp.ge.f32.partialorder %v1124, 0.0
        %vm1165 = vcmp.ge.f32.partialorder %v1126, 0.0
        %vm1166 = vcmp.ge.f32.partialorder %v1130, 0.0
        %vm1167 = vcmp.ge.f32.partialorder %v1132, 0.0
        %vm1168 = vcmp.ge.f32.partialorder %v1134, 0.0
        %vm1169 = vcmp.ge.f32.partialorder %v1136, 0.0
        %v1170 = vmul.f32 %v1060, 0.2
        %v1171 = vmul.f32 %v1062, 0.2
        %v1172 = vmul.f32 %v1064, 0.2
        %v1173 = vmul.f32 %v1066, 0.2
        %v1174 = vmul.f32 %v1070, 0.2
        %v1175 = vmul.f32 %v1072, 0.2
        %v1176 = vmul.f32 %v1074, 0.2
        %v1177 = vmul.f32 %v1076, 0.2
        %v1178 = vmul.f32 %v1080, 0.2
        %v1179 = vmul.f32 %v1082, 0.2
        %v1180 = vmul.f32 %v1084, 0.2
        %v1181 = vmul.f32 %v1086, 0.2
        %v1182 = vmul.f32 %v1090, 0.2
        %v1183 = vmul.f32 %v1092, 0.2
        %v1184 = vmul.f32 %v1094, 0.2
        %v1185 = vmul.f32 %v1096, 0.2
        %v1186 = vmul.f32 %v1100, 0.2
        %v1187 = vmul.f32 %v1102, 0.2
        %v1188 = vmul.f32 %v1104, 0.2
        %v1189 = vmul.f32 %v1106, 0.2
        %v1190 = vmul.f32 %v1110, 0.2
        %v1191 = vmul.f32 %v1112, 0.2
        %v1192 = vmul.f32 %v1114, 0.2
        %v1193 = vmul.f32 %v1116, 0.2
        %v1194 = vmul.f32 %v1120, 0.2
        %v1195 = vmul.f32 %v1122, 0.2
        %v1196 = vmul.f32 %v1124, 0.2
        %v1197 = vmul.f32 %v1126, 0.2
        %v1198 = vmul.f32 %v1130, 0.2
        %v1199 = vmul.f32 %v1132, 0.2
        %v1200 = vmul.f32 %v1134, 0.2
        %v1201 = vmul.f32 %v1136, 0.2
        %v1202 = vsel %vm1138, %v1060, %v1170
        %v1203 = vsel %vm1139, %v1062, %v1171
        %v1204 = vsel %vm1140, %v1064, %v1172
        %v1205 = vsel %vm1141, %v1066, %v1173
        %v1206 = vsel %vm1142, %v1070, %v1174
        %v1207 = vsel %vm1143, %v1072, %v1175
        %v1208 = vsel %vm1144, %v1074, %v1176
        %v1209 = vsel %vm1145, %v1076, %v1177
        %v1210 = vsel %vm1146, %v1080, %v1178
        %v1211 = vsel %vm1147, %v1082, %v1179
        %v1212 = vsel %vm1148, %v1084, %v1180
        %v1213 = vsel %vm1149, %v1086, %v1181
        %v1214 = vsel %vm1150, %v1090, %v1182
        %v1215 = vsel %vm1151, %v1092, %v1183
        %v1216 = vsel %vm1152, %v1094, %v1184
        %v1217 = vsel %vm1153, %v1096, %v1185
        %v1218 = vsel %vm1154, %v1100, %v1186
        %v1219 = vsel %vm1155, %v1102, %v1187
        %v1220 = vsel %vm1156, %v1104, %v1188
        %v1221 = vsel %vm1157, %v1106, %v1189
        %v1222 = vsel %vm1158, %v1110, %v1190
        %v1223 = vsel %vm1159, %v1112, %v1191
        %v1224 = vsel %vm1160, %v1114, %v1192
        %v1225 = vsel %vm1161, %v1116, %v1193
        %v1226 = vsel %vm1162, %v1120, %v1194
        %v1227 = vsel %vm1163, %v1122, %v1195
        %v1228 = vsel %vm1164, %v1124, %v1196
        %v1229 = vsel %vm1165, %v1126, %v1197
        %v1230 = vsel %vm1166, %v1130, %v1198
        %v1231 = vsel %vm1167, %v1132, %v1199
        %v1232 = vsel %vm1168, %v1134, %v1200
        %v1233 = vsel %vm1169, %v1136, %v1201
        %v1234 = vpack.c.bf16 %v1204, %v1202
        %v1235 = vpack.c.bf16 %v1205, %v1203
        %v1236 = vpack.c.bf16 %v1208, %v1206
        %v1237 = vpack.c.bf16 %v1209, %v1207
        %v1238 = vpack.c.bf16 %v1212, %v1210
        %v1239 = vpack.c.bf16 %v1213, %v1211
        %v1240 = vpack.c.bf16 %v1216, %v1214
        %v1241 = vpack.c.bf16 %v1217, %v1215
        %v1242 = vpack.c.bf16 %v1220, %v1218
        %v1243 = vpack.c.bf16 %v1221, %v1219
        %v1244 = vpack.c.bf16 %v1224, %v1222
        %v1245 = vpack.c.bf16 %v1225, %v1223
        %v1246 = vpack.c.bf16 %v1228, %v1226
        %v1247 = vpack.c.bf16 %v1229, %v1227
        %v1248 = vpack.c.bf16 %v1232, %v1230
        %v1249 = vpack.c.bf16 %v1233, %v1231
        %v1250 = vld [vmem:[#allocation8] sm:$0xff]
        %v1251 = vld [vmem:[#allocation8 + $0x8] sm:$0xff]
        %v1252 = vld [vmem:[#allocation8 + $0x10] sm:$0xff]
        %v1253 = vld [vmem:[#allocation8 + $0x18] sm:$0xff]
        %v1254 = vld [vmem:[#allocation8 + $0x20] sm:$0xff]
        %v1255 = vld [vmem:[#allocation8 + $0x28] sm:$0xff]
        %v1256 = vld [vmem:[#allocation8 + $0x30] sm:$0xff]
        %v1257 = vld [vmem:[#allocation8 + $0x38] sm:$0xff]
        %v1258 = vld [vmem:[#allocation8 + $0x40] sm:$0xff]
        %v1259 = vld [vmem:[#allocation8 + $0x48] sm:$0xff]
        %v1260 = vld [vmem:[#allocation8 + $0x50] sm:$0xff]
        %v1261 = vld [vmem:[#allocation8 + $0x58] sm:$0xff]
        %v1262 = vld [vmem:[#allocation8 + $0x60] sm:$0xff]
        %v1263 = vld [vmem:[#allocation8 + $0x68] sm:$0xff]
        %v1264 = vld [vmem:[#allocation8 + $0x70] sm:$0xff]
        %v1265 = vld [vmem:[#allocation8 + $0x78] sm:$0xff]
        %v1266 = vld [vmem:[#allocation8 + $0x80] sm:$0xff]
        %v1267 = vld [vmem:[#allocation8 + $0x88] sm:$0xff]
        %v1268 = vld [vmem:[#allocation8 + $0x90] sm:$0xff]
        %v1269 = vld [vmem:[#allocation8 + $0x98] sm:$0xff]
        %v1270 = vld [vmem:[#allocation8 + $0xa0] sm:$0xff]
        %v1271 = vld [vmem:[#allocation8 + $0xa8] sm:$0xff]
        %v1272 = vld [vmem:[#allocation8 + $0xb0] sm:$0xff]
        %v1273 = vld [vmem:[#allocation8 + $0xb8] sm:$0xff]
        %v1274 = vld [vmem:[#allocation8 + $0xc0] sm:$0xff]
        %v1275 = vld [vmem:[#allocation8 + $0xc8] sm:$0xff]
        %v1276 = vld [vmem:[#allocation8 + $0xd0] sm:$0xff]
        %v1277 = vld [vmem:[#allocation8 + $0xd8] sm:$0xff]
        %v1278 = vld [vmem:[#allocation8 + $0xe0] sm:$0xff]
        %v1279 = vld [vmem:[#allocation8 + $0xe8] sm:$0xff]
        %v1280 = vld [vmem:[#allocation8 + $0xf0] sm:$0xff]
        %v1281 = vld [vmem:[#allocation8 + $0xf8] sm:$0xff]
        %v1282 = vld [vmem:[%s6] sm:$0x3]
        %v1284 = vlaneseq
        %v1285 = vshrl.u32 %v1284, 7
        %v1286 = vsub.s32 0, %v1285
        %v1287 = vrot.slane %v1282, %v1286
        %v1288 = vlaneseq
        %v1289 = vshrl.u32 %v1288, 7
        %v1290 = vsub.s32 1, %v1289
        %v1291 = vrot.slane %v1282, %v1290
        %v1326 = vunpack.c.l.b16 %v1250
        %v1327 = vunpack.c.h.b16 %v1250
        %v1328 = vunpack.c.l.b16 %v1251
        %v1329 = vunpack.c.h.b16 %v1251
        %v1330 = vunpack.c.l.b16 %v1252
        %v1331 = vunpack.c.h.b16 %v1252
        %v1332 = vunpack.c.l.b16 %v1253
        %v1333 = vunpack.c.h.b16 %v1253
        %v1334 = vunpack.c.l.b16 %v1254
        %v1335 = vunpack.c.h.b16 %v1254
        %v1336 = vunpack.c.l.b16 %v1255
        %v1337 = vunpack.c.h.b16 %v1255
        %v1338 = vunpack.c.l.b16 %v1256
        %v1339 = vunpack.c.h.b16 %v1256
        %v1340 = vunpack.c.l.b16 %v1257
        %v1341 = vunpack.c.h.b16 %v1257
        %v1342 = vunpack.c.l.b16 %v1258
        %v1343 = vunpack.c.h.b16 %v1258
        %v1344 = vunpack.c.l.b16 %v1259
        %v1345 = vunpack.c.h.b16 %v1259
        %v1346 = vunpack.c.l.b16 %v1260
        %v1347 = vunpack.c.h.b16 %v1260
        %v1348 = vunpack.c.l.b16 %v1261
        %v1349 = vunpack.c.h.b16 %v1261
        %v1350 = vunpack.c.l.b16 %v1262
        %v1351 = vunpack.c.h.b16 %v1262
        %v1352 = vunpack.c.l.b16 %v1263
        %v1353 = vunpack.c.h.b16 %v1263
        %v1354 = vunpack.c.l.b16 %v1264
        %v1355 = vunpack.c.h.b16 %v1264
        %v1356 = vunpack.c.l.b16 %v1265
        %v1357 = vunpack.c.h.b16 %v1265
        %v1358 = vunpack.c.l.b16 %v1266
        %v1359 = vunpack.c.h.b16 %v1266
        %v1360 = vunpack.c.l.b16 %v1267
        %v1361 = vunpack.c.h.b16 %v1267
        %v1362 = vunpack.c.l.b16 %v1268
        %v1363 = vunpack.c.h.b16 %v1268
        %v1364 = vunpack.c.l.b16 %v1269
        %v1365 = vunpack.c.h.b16 %v1269
        %v1366 = vunpack.c.l.b16 %v1270
        %v1367 = vunpack.c.h.b16 %v1270
        %v1368 = vunpack.c.l.b16 %v1271
        %v1369 = vunpack.c.h.b16 %v1271
        %v1370 = vunpack.c.l.b16 %v1272
        %v1371 = vunpack.c.h.b16 %v1272
        %v1372 = vunpack.c.l.b16 %v1273
        %v1373 = vunpack.c.h.b16 %v1273
        %v1374 = vunpack.c.l.b16 %v1274
        %v1375 = vunpack.c.h.b16 %v1274
        %v1376 = vunpack.c.l.b16 %v1275
        %v1377 = vunpack.c.h.b16 %v1275
        %v1378 = vunpack.c.l.b16 %v1276
        %v1379 = vunpack.c.h.b16 %v1276
        %v1380 = vunpack.c.l.b16 %v1277
        %v1381 = vunpack.c.h.b16 %v1277
        %v1382 = vunpack.c.l.b16 %v1278
        %v1383 = vunpack.c.h.b16 %v1278
        %v1384 = vunpack.c.l.b16 %v1279
        %v1385 = vunpack.c.h.b16 %v1279
        %v1386 = vunpack.c.l.b16 %v1280
        %v1387 = vunpack.c.h.b16 %v1280
        %v1388 = vunpack.c.l.b16 %v1281
        %v1389 = vunpack.c.h.b16 %v1281
        %v1390 = vpack.c.b16 %v1328, %v1326
        %v1391 = vpack.c.b16 %v1329, %v1327
        %v1392 = vpack.c.b16 %v1332, %v1330
        %v1393 = vpack.c.b16 %v1333, %v1331
        %v1394 = vpack.c.b16 %v1336, %v1334
        %v1395 = vpack.c.b16 %v1337, %v1335
        %v1396 = vpack.c.b16 %v1340, %v1338
        %v1397 = vpack.c.b16 %v1341, %v1339
        %v1398 = vpack.c.b16 %v1344, %v1342
        %v1399 = vpack.c.b16 %v1345, %v1343
        %v1400 = vpack.c.b16 %v1348, %v1346
        %v1401 = vpack.c.b16 %v1349, %v1347
        %v1402 = vpack.c.b16 %v1352, %v1350
        %v1403 = vpack.c.b16 %v1353, %v1351
        %v1404 = vpack.c.b16 %v1356, %v1354
        %v1405 = vpack.c.b16 %v1357, %v1355
        %v1406 = vpack.c.b16 %v1360, %v1358
        %v1407 = vpack.c.b16 %v1361, %v1359
        %v1408 = vpack.c.b16 %v1364, %v1362
        %v1409 = vpack.c.b16 %v1365, %v1363
        %v1410 = vpack.c.b16 %v1368, %v1366
        %v1411 = vpack.c.b16 %v1369, %v1367
        %v1412 = vpack.c.b16 %v1372, %v1370
        %v1413 = vpack.c.b16 %v1373, %v1371
        %v1414 = vpack.c.b16 %v1376, %v1374
        %v1415 = vpack.c.b16 %v1377, %v1375
        %v1416 = vpack.c.b16 %v1380, %v1378
        %v1417 = vpack.c.b16 %v1381, %v1379
        %v1418 = vpack.c.b16 %v1384, %v1382
        %v1419 = vpack.c.b16 %v1385, %v1383
        %v1420 = vpack.c.b16 %v1388, %v1386
        %v1421 = vpack.c.b16 %v1389, %v1387
        %1454 = vmatprep.subr.bf16.mxu0 %v1405
        %1455 = vmatpush1.bf16.msra.mxu0 %v1404
        %1456 = vmatprep.subr.bf16.mxu0 %v1403
        %1457 = vmatpush1.bf16.msra.mxu0 %v1402
        %1458 = vmatprep.subr.bf16.mxu0 %v1401
        %1459 = vmatpush1.bf16.msra.mxu0 %v1400
        %1460 = vmatprep.subr.bf16.mxu0 %v1399
        %1461 = vmatpush1.bf16.msra.mxu0 %v1398
        %1462 = vmatprep.subr.bf16.mxu0 %v1397
        %1463 = vmatpush1.bf16.msra.mxu0 %v1396
        %1464 = vmatprep.subr.bf16.mxu0 %v1395
        %1465 = vmatpush1.bf16.msra.mxu0 %v1394
        %1466 = vmatprep.subr.bf16.mxu0 %v1393
        %1467 = vmatpush1.bf16.msra.mxu0 %v1392
        %1468 = vmatprep.subr.bf16.mxu0 %v1391
        %1469 = vmatpush1.bf16.msra.mxu0 %v1390
        %1470 = vmatprep.subr.bf16.mxu0 %v1421
        %1471 = vmatpush2.bf16.msra.mxu0 %v1420
        %1472 = vmatprep.subr.bf16.mxu0 %v1419
        %1473 = vmatpush2.bf16.msra.mxu0 %v1418
        %1474 = vmatprep.subr.bf16.mxu0 %v1417
        %1475 = vmatpush2.bf16.msra.mxu0 %v1416
        %1476 = vmatprep.subr.bf16.mxu0 %v1415
        %1477 = vmatpush2.bf16.msra.mxu0 %v1414
        %1478 = vmatprep.subr.bf16.mxu0 %v1413
        %1479 = vmatpush2.bf16.msra.mxu0 %v1412
        %1480 = vmatprep.subr.bf16.mxu0 %v1411
        %1481 = vmatpush2.bf16.msra.mxu0 %v1410
        %1482 = vmatprep.subr.bf16.mxu0 %v1409
        %1483 = vmatpush2.bf16.msra.mxu0 %v1408
        %1484 = vmatprep.subr.bf16.mxu0 %v1407
        %1485 = vmatpush2.bf16.msra.mxu0 %v1406
        %1486 = vmatprep.mubr.bf16.mxu0 %v1235
        %1487 = vmatmul.mubr.bf16.gmra.mxu0 %v1234
        %v1488 = vpop.f32.mrf.mxu0
        %v1489 = vadd.f32 %v1287, %v1488
        %v1490 = vpop.f32.mrf.mxu0
        %v1491 = vadd.f32 %v1291, %v1490
        %v1492 = vpop.f32.mrf.mxu0
        %v1493 = vadd.f32 %v1287, %v1492
        %v1494 = vpop.f32.mrf.mxu0
        %v1495 = vadd.f32 %v1291, %v1494
        %1496 = vmatprep.mubr.bf16.mxu0 %v1237
        %1497 = vmatmul.mubr.bf16.gmra.mxu0 %v1236
        %v1498 = vpop.f32.mrf.mxu0
        %v1499 = vadd.f32 %v1287, %v1498
        %v1500 = vpop.f32.mrf.mxu0
        %v1501 = vadd.f32 %v1291, %v1500
        %v1502 = vpop.f32.mrf.mxu0
        %v1503 = vadd.f32 %v1287, %v1502
        %v1504 = vpop.f32.mrf.mxu0
        %v1505 = vadd.f32 %v1291, %v1504
        %1506 = vmatprep.mubr.bf16.mxu0 %v1239
        %1507 = vmatmul.mubr.bf16.gmra.mxu0 %v1238
        %v1508 = vpop.f32.mrf.mxu0
        %v1509 = vadd.f32 %v1287, %v1508
        %v1510 = vpop.f32.mrf.mxu0
        %v1511 = vadd.f32 %v1291, %v1510
        %v1512 = vpop.f32.mrf.mxu0
        %v1513 = vadd.f32 %v1287, %v1512
        %v1514 = vpop.f32.mrf.mxu0
        %v1515 = vadd.f32 %v1291, %v1514
        %1516 = vmatprep.mubr.bf16.mxu0 %v1241
        %1517 = vmatmul.mubr.bf16.gmra.mxu0 %v1240
        %v1518 = vpop.f32.mrf.mxu0
        %v1519 = vadd.f32 %v1287, %v1518
        %v1520 = vpop.f32.mrf.mxu0
        %v1521 = vadd.f32 %v1291, %v1520
        %v1522 = vpop.f32.mrf.mxu0
        %v1523 = vadd.f32 %v1287, %v1522
        %v1524 = vpop.f32.mrf.mxu0
        %v1525 = vadd.f32 %v1291, %v1524
        %1526 = vmatprep.mubr.bf16.mxu0 %v1243
        %1527 = vmatmul.mubr.bf16.gmra.mxu0 %v1242
        %v1528 = vpop.f32.mrf.mxu0
        %v1529 = vadd.f32 %v1287, %v1528
        %v1530 = vpop.f32.mrf.mxu0
        %v1531 = vadd.f32 %v1291, %v1530
        %v1532 = vpop.f32.mrf.mxu0
        %v1533 = vadd.f32 %v1287, %v1532
        %v1534 = vpop.f32.mrf.mxu0
        %v1535 = vadd.f32 %v1291, %v1534
        %1536 = vmatprep.mubr.bf16.mxu0 %v1245
        %1537 = vmatmul.mubr.bf16.gmra.mxu0 %v1244
        %v1538 = vpop.f32.mrf.mxu0
        %v1539 = vadd.f32 %v1287, %v1538
        %v1540 = vpop.f32.mrf.mxu0
        %v1541 = vadd.f32 %v1291, %v1540
        %v1542 = vpop.f32.mrf.mxu0
        %v1543 = vadd.f32 %v1287, %v1542
        %v1544 = vpop.f32.mrf.mxu0
        %v1545 = vadd.f32 %v1291, %v1544
        %1546 = vmatprep.mubr.bf16.mxu0 %v1247
        %1547 = vmatmul.mubr.bf16.gmra.mxu0 %v1246
        %v1548 = vpop.f32.mrf.mxu0
        %v1549 = vadd.f32 %v1287, %v1548
        %v1550 = vpop.f32.mrf.mxu0
        %v1551 = vadd.f32 %v1291, %v1550
        %v1552 = vpop.f32.mrf.mxu0
        %v1553 = vadd.f32 %v1287, %v1552
        %v1554 = vpop.f32.mrf.mxu0
        %v1555 = vadd.f32 %v1291, %v1554
        %1556 = vmatprep.mubr.bf16.mxu0 %v1249
        %1557 = vmatmul.mubr.bf16.gmra.mxu0 %v1248
        %v1558 = vpop.f32.mrf.mxu0
        %v1559 = vadd.f32 %v1287, %v1558
        %v1560 = vpop.f32.mrf.mxu0
        %v1561 = vadd.f32 %v1291, %v1560
        %v1562 = vpop.f32.mrf.mxu0
        %v1563 = vadd.f32 %v1287, %v1562
        %v1564 = vpop.f32.mrf.mxu0
        %v1565 = vadd.f32 %v1291, %v1564
        %1566 = vdwg.mxu0
        %1567 = vst [vmem:[%s341] sm:$0xff] %v1489
        %1568 = vst [vmem:[%s341 + $0x8] sm:$0xff] %v1491
        %1569 = vst [vmem:[%s341 + $0x10] sm:$0xff] %v1493
        %1570 = vst [vmem:[%s341 + $0x18] sm:$0xff] %v1495
        %1571 = vst [vmem:[%s341 + $0x20] sm:$0xff] %v1499
        %1572 = vst [vmem:[%s341 + $0x28] sm:$0xff] %v1501
        %1573 = vst [vmem:[%s341 + $0x30] sm:$0xff] %v1503
        %1574 = vst [vmem:[%s341 + $0x38] sm:$0xff] %v1505
        %1575 = vst [vmem:[%s341 + $0x40] sm:$0xff] %v1509
        %1576 = vst [vmem:[%s341 + $0x48] sm:$0xff] %v1511
        %1577 = vst [vmem:[%s341 + $0x50] sm:$0xff] %v1513
        %1578 = vst [vmem:[%s341 + $0x58] sm:$0xff] %v1515
        %1579 = vst [vmem:[%s341 + $0x60] sm:$0xff] %v1519
        %1580 = vst [vmem:[%s341 + $0x68] sm:$0xff] %v1521
        %1581 = vst [vmem:[%s341 + $0x70] sm:$0xff] %v1523
        %1582 = vst [vmem:[%s341 + $0x78] sm:$0xff] %v1525
        %1583 = vst [vmem:[%s341 + $0x80] sm:$0xff] %v1529
        %1584 = vst [vmem:[%s341 + $0x88] sm:$0xff] %v1531
        %1585 = vst [vmem:[%s341 + $0x90] sm:$0xff] %v1533
        %1586 = vst [vmem:[%s341 + $0x98] sm:$0xff] %v1535
        %1587 = vst [vmem:[%s341 + $0xa0] sm:$0xff] %v1539
        %1588 = vst [vmem:[%s341 + $0xa8] sm:$0xff] %v1541
        %1589 = vst [vmem:[%s341 + $0xb0] sm:$0xff] %v1543
        %1590 = vst [vmem:[%s341 + $0xb8] sm:$0xff] %v1545
        %1591 = vst [vmem:[%s341 + $0xc0] sm:$0xff] %v1549
        %1592 = vst [vmem:[%s341 + $0xc8] sm:$0xff] %v1551
        %1593 = vst [vmem:[%s341 + $0xd0] sm:$0xff] %v1553
        %1594 = vst [vmem:[%s341 + $0xd8] sm:$0xff] %v1555
        %1595 = vst [vmem:[%s341 + $0xe0] sm:$0xff] %v1559
        %1596 = vst [vmem:[%s341 + $0xe8] sm:$0xff] %v1561
        %1597 = vst [vmem:[%s341 + $0xf0] sm:$0xff] %v1563
        %1598 = vst [vmem:[%s341 + $0xf8] sm:$0xff] %v1565
        %s1599 = sand.u32 %s186, 1
        %s1600 = scalar_lea.sflag [#allocation4], %s1599
        %s1601 = sand.u32 %s186, 1
        %s1602 = smul.addr %s1601, 256
        %s1603 = scalar_lea.vmem [#allocation10], %s1602
        // Predicated region
        $region65: #{tpu_custom_call.1} parent=47 // pred_check
          %p1604 = pneg %p196
        $region66: #{tpu_custom_call.1} parent=47 // pred_check_branch
          %1606 = sbr.rel (%p1604) target = $region68
        $region67: #{tpu_custom_call.1} parent=47 // pred_region
          %s1607 = smul.u32 16, %s26
          %s1609 = ssub.s32 4096, 4096
          %1610 = vsyncadd %s1600, %s1609
          %s1611 = smul.addr %s1607, 2
          %s1612 = smul.addr %s1611, 128
          %s1613 = scalar_lea.hbm %s7, %s1612
          %s1614 = sshll.u32 %s1603, 4
          %s1615 = int_to_ptr.vmem [resolvable:$true] %s1614
          %1620 = dma.vmem_to_hbm [thread:$0]  %s1615, 4096, %s1613, %s1600, 256, 256, 16
        $region68: #{tpu_custom_call.1} parent=47 // pred_fallthru
          _
      $region48: #{tpu_custom_call.1} parent=5 // pred_fallthru
        _
      %p1621 = scmp.le.s32.totalorder 2, %s21
      // Predicated region
      $region69: #{tpu_custom_call.1} parent=5 // pred_check
        %p1622 = pneg %p1621
      $region70: #{tpu_custom_call.1} parent=5 // pred_check_branch
        %1624 = sbr.rel (%p1622) target = $region72
      $region71: #{tpu_custom_call.1} parent=5 // pred_region
        %s1625 = ssub.s32 %s21, 2
        // Predicated region
        $region73: #{tpu_custom_call.1} parent=71 // pred_check
          %p1626 = pneg %p202
        $region74: #{tpu_custom_call.1} parent=71 // pred_check_branch
          %1628 = sbr.rel (%p1626) target = $region76
        $region75: #{tpu_custom_call.1} parent=71 // pred_region
          %s1629 = sand.u32 %s187, 1
          %s1630 = scalar_lea.sflag [#allocation4], %s1629
          %s1631 = sand.u32 %s187, 1
          %s1632 = smul.addr %s1631, 256
          %s1633 = scalar_lea.vmem [#allocation10], %s1632
          %1634 = dma.done %s1630, 4096
        $region76: #{tpu_custom_call.1} parent=71 // pred_fallthru
          _
      $region72: #{tpu_custom_call.1} parent=5 // pred_fallthru
        _
    $region6: #{tpu_custom_call.1} parent=1 // loop_footer
      %s25 = sadd.s32 1, %s21
    $region7: #{tpu_custom_call.1} parent=1 // loop_footer_branch
      %20 = sbr.rel target = $region3
    $region8: #{tpu_custom_call.1} parent=1 // loop_exit
      _
    %1635 = vsyncpa [#allocation3], 1
    %s1636 = scalar_lea.sflag [#allocation3], 1
    %1637 = vsyncpa %s1636, 1
    %1638 = vsyncpa [#allocation6], 1
    %1639 = vsyncpa [#allocation9], 1
    %1640 = vsyncpa [#allocation4], 1
    %s1641 = scalar_lea.sflag [#allocation4], 1
    %1642 = vsyncpa %s1641, 1

</llo_original>
